<compile_context>
chip_gen: v6e
topology: v6e:2x2x1
jax: 0.10.0
libtpu: 0.0.40
codegen_flags: <defaults>
</compile_context>

<pallas_src>
import functools

import jax
import jax.numpy as jnp
from jax import lax
from jax.experimental import pallas as pl
from jax.experimental.pallas import tpu as pltpu

INPUT_DIM = 4
HIDDEN_DIM = 32
NUM_LAYERS = 2
OUTPUT_DIM = 1


def _gru_fc_kernel(x_ref,      # (T*B, D)   bf16, time-major rows (t-major, b-minor)
                   wih0_ref,   # (D, 3H)    bf16, layer-0 input proj [r|z|n]
                   bih0_ref,   # (1, 3H)    f32,  b_ih_l0 + b_hh_l0 folded for r,z
                   wih1_ref,   # (H, 3H)    bf16, layer-1 input proj [r|z|n]
                   bih1_ref,   # (1, 3H)    f32,  b_ih_l1 + b_hh_l1 folded for r,z
                   whh_ref,    # (2H, 6H)   bf16, block-diag recurrent [l0 | l1]
                   bhn_ref,    # (1, 2H)    f32,  [b_hh_l0_n | b_hh_l1_n]
                   wfc_ref,    # (1, H)     f32,  folded fc2->fc row vector
                   bfc_ref,    # (1, 1)     f32
                   out_ref,    # (B, 1)     f32
                   *, seq_len, batch):
    f32 = jnp.float32
    bf16 = jnp.bfloat16
    H = HIDDEN_DIM
    T = seq_len
    B = batch

    wih1 = wih1_ref[...]
    bih1 = bih1_ref[...]
    whh = whh_ref[...]
    bhn = bhn_ref[...]
    bhn0 = bhn[:, 0:H]
    bhn1 = bhn[:, H:2 * H]

    # ---- Hoisted layer-0 input projection (time-independent): one MXU call,
    #      entirely off the serial recurrence critical path. Biases (incl. the
    #      folded r/z recurrent biases) are added here, off-chain. ----
    gi0_all = (jnp.dot(x_ref[...], wih0_ref[...], preferred_element_type=f32)
               + bih0_ref[...])                                      # (T*B, 3H)

    h0 = jnp.zeros((B, H), f32)
    h1 = jnp.zeros((B, H), f32)
    hcat_b = jnp.zeros((B, 2 * H), bf16)                             # [h0 | h1]

    # T is small and static -> fully unrolled Python loop (post-compaction the
    # live weight set is ~12 vregs, so no spill pressure).
    for t in range(T):
        # One fused recurrent matmul for BOTH layers (block-diagonal weights);
        # only depends on the previous-step carries. bf16 operands, f32 acc.
        gh = jnp.dot(hcat_b, whh, preferred_element_type=f32)        # (B, 6H)

        # Precomputed layer-0 input gates for this step: contiguous sublane
        # slice (time-major layout).
        gi0 = gi0_all[t * B:(t + 1) * B, :]                          # (B, 3H)

        # --- layer 0 (PyTorch gate order [r | z | n], 32-lane gate slots) ---
        r0 = jax.nn.sigmoid(gi0[:, 0:H] + gh[:, 0:H])
        z0 = jax.nn.sigmoid(gi0[:, H:2 * H] + gh[:, H:2 * H])
        n0 = jnp.tanh(gi0[:, 2 * H:3 * H] + r0 * (gh[:, 2 * H:3 * H] + bhn0))
        h0 = (1.0 - z0) * n0 + z0 * h0

        # --- layer 1: only this matmul sits on the intra-step serial chain ---
        h0_b = h0.astype(bf16)
        gi1 = jnp.dot(h0_b, wih1, preferred_element_type=f32) + bih1  # (B, 3H)
        r1 = jax.nn.sigmoid(gi1[:, 0:H] + gh[:, 3 * H:4 * H])
        z1 = jax.nn.sigmoid(gi1[:, H:2 * H] + gh[:, 4 * H:5 * H])
        n1 = jnp.tanh(gi1[:, 2 * H:3 * H] + r1 * (gh[:, 5 * H:6 * H] + bhn1))
        h1 = (1.0 - z1) * n1 + z1 * h1

        if t + 1 < T:
            hcat_b = jnp.concatenate([h0_b, h1.astype(bf16)], axis=-1)

    # ---- folded fc2 -> fc epilogue: VPU multiply + lane reduction (no N=1
    #      MXU push / masked FIFO drain). ----
    out_ref[...] = (jnp.sum(h1 * wfc_ref[...], axis=-1, keepdims=True)
                    + bfc_ref[...])


def init_params(key, input_dim=INPUT_DIM, hidden_dim=HIDDEN_DIM,
                output_dim=OUTPUT_DIM):
    """PyTorch-layout parameters with U(-1/sqrt(H), 1/sqrt(H)) init."""
    ks = jax.random.split(key, 12)
    s = 1.0 / jnp.sqrt(hidden_dim)
    u = lambda k, shape: jax.random.uniform(k, shape, jnp.float32, -s, s)
    return {
        # GRU layer 0 (input_dim -> hidden_dim)
        "w_ih_l0": u(ks[0], (3 * hidden_dim, input_dim)),
        "w_hh_l0": u(ks[1], (3 * hidden_dim, hidden_dim)),
        "b_ih_l0": u(ks[2], (3 * hidden_dim,)),
        "b_hh_l0": u(ks[3], (3 * hidden_dim,)),
        # GRU layer 1 (hidden_dim -> hidden_dim)
        "w_ih_l1": u(ks[4], (3 * hidden_dim, hidden_dim)),
        "w_hh_l1": u(ks[5], (3 * hidden_dim, hidden_dim)),
        "b_ih_l1": u(ks[6], (3 * hidden_dim,)),
        "b_hh_l1": u(ks[7], (3 * hidden_dim,)),
        # fc2: Linear(hidden_dim, hidden_dim)
        "fc2_w": u(ks[8], (hidden_dim, hidden_dim)),
        "fc2_b": u(ks[9], (hidden_dim,)),
        # fc: Linear(hidden_dim, output_dim)
        "fc_w": u(ks[10], (output_dim, hidden_dim)),
        "fc_b": u(ks[11], (output_dim,)),
    }


def pack_params(params):
    """One-time repack of PyTorch-layout params into the compact kernel layout.

    - weights transposed so the kernel computes `activations @ W`,
    - compact 32-lane gate slots (no zero padding), matmul weights in bf16,
    - the two recurrent matrices packed block-diagonally: (2H, 6H),
    - r/z-gate recurrent biases folded (exactly) into the input biases; only
      the n-gate b_hh survives separately,
    - fc2 and fc folded into a single (1, H) row + scalar bias (f32, VPU path).
    Call once, outside the jitted forward.
    """
    H, D, O = HIDDEN_DIM, INPUT_DIM, OUTPUT_DIM
    f32, bf16 = jnp.float32, jnp.bfloat16

    w_ih_l0 = params["w_ih_l0"].astype(f32)    # (3H, D)
    w_hh_l0 = params["w_hh_l0"].astype(f32)    # (3H, H)
    w_ih_l1 = params["w_ih_l1"].astype(f32)    # (3H, H)
    w_hh_l1 = params["w_hh_l1"].astype(f32)    # (3H, H)
    b_ih_l0 = params["b_ih_l0"].astype(f32)
    b_hh_l0 = params["b_hh_l0"].astype(f32)
    b_ih_l1 = params["b_ih_l1"].astype(f32)
    b_hh_l1 = params["b_hh_l1"].astype(f32)

    wih0 = w_ih_l0.T.astype(bf16)              # (D, 3H)
    wih1 = w_ih_l1.T.astype(bf16)              # (H, 3H)

    # Block-diagonal recurrent weights: rows 0:H drive layer-0 gates (cols
    # 0:3H), rows H:2H drive layer-1 gates (cols 3H:6H).
    whh = jnp.zeros((2 * H, 6 * H), f32)
    whh = whh.at[:H, :3 * H].set(w_hh_l0.T)
    whh = whh.at[H:, 3 * H:].set(w_hh_l1.T)
    whh = whh.astype(bf16)                     # (2H, 6H)

    # Fold b_hh for the r and z gates into b_ih (exact: r = sigmoid(Wi x + bi
    # + Wh h + bh)); the n-gate b_hh must stay separate (r * (Wh h + bh_n)).
    def fold_bias(b_ih, b_hh):
        return b_ih.at[:2 * H].add(b_hh[:2 * H]).reshape(1, 3 * H)

    bih0 = fold_bias(b_ih_l0, b_hh_l0)                                # (1, 3H)
    bih1 = fold_bias(b_ih_l1, b_hh_l1)                                # (1, 3H)
    bhn = jnp.concatenate([b_hh_l0[2 * H:], b_hh_l1[2 * H:]]).reshape(1, 2 * H)

    # Fold fc2 then fc:  (h @ A^T + c) @ B^T + d  ==  h @ (A^T B^T) + (c B^T + d)
    hi = lax.Precision.HIGHEST
    wfc = jnp.dot(params["fc_w"].astype(f32), params["fc2_w"].astype(f32),
                  precision=hi)                                       # (1, H)
    bfc = (jnp.dot(params["fc2_b"].astype(f32).reshape(1, H),
                   params["fc_w"].astype(f32).T, precision=hi)
           + params["fc_b"].astype(f32).reshape(1, O))                # (1, 1)

    return {"wih0": wih0, "bih0": bih0, "wih1": wih1, "bih1": bih1,
            "whh": whh, "bhn": bhn, "wfc": wfc, "bfc": bfc}


@jax.jit
def baseline_gru_forward(x, packed):
    """x: (B, T, input_dim) float32, packed: pack_params(...) -> (B, 1)."""
    B, T, D = x.shape
    # Time-major relayout: (B,T,D) -> (T,B,D) -> (T*B,D).  It is 256 bytes, so
    # the transpose is free in the wrapper and buys a contiguous static
    # sublane slice per unrolled timestep inside the recurrence.
    x2d = jnp.transpose(x, (1, 0, 2)).reshape(T * B, D).astype(jnp.bfloat16)

    vmem = pl.BlockSpec(memory_space=pltpu.MemorySpace.VMEM)
    kernel = functools.partial(_gru_fc_kernel, seq_len=T, batch=B)

    # Single invocation, no grid: total VMEM footprint is a few tens of KiB;
    # on v5e/v6e (one TensorCore) any gridding is pure per-step overhead.
    return pl.pallas_call(
        kernel,
        out_shape=jax.ShapeDtypeStruct((B, OUTPUT_DIM), jnp.float32),
        in_specs=[vmem] * 9,
        out_specs=vmem,
    )(x2d, packed["wih0"], packed["bih0"], packed["wih1"], packed["bih1"],
      packed["whh"], packed["bhn"], packed["wfc"], packed["bfc"])


def _reference_forward(x, params):
    """Pure-JAX f32 reference of the same semantics (sanity check)."""
    B, T, D = x.shape
    H = HIDDEN_DIM

    def cell(x_t, h, w_ih, w_hh, b_ih, b_hh):
        gi = x_t @ w_ih.T + b_ih
        gh = h @ w_hh.T + b_hh
        r = jax.nn.sigmoid(gi[:, :H] + gh[:, :H])
        z = jax.nn.sigmoid(gi[:, H:2 * H] + gh[:, H:2 * H])
        n = jnp.tanh(gi[:, 2 * H:] + r * gh[:, 2 * H:])
        return (1.0 - z) * n + z * h

    h0 = jnp.zeros((B, H), jnp.float32)
    h1 = jnp.zeros((B, H), jnp.float32)
    for t in range(T):
        h0 = cell(x[:, t, :], h0, params["w_ih_l0"], params["w_hh_l0"],
                  params["b_ih_l0"], params["b_hh_l0"])
        h1 = cell(h0, h1, params["w_ih_l1"], params["w_hh_l1"],
                  params["b_ih_l1"], params["b_hh_l1"])
    y = h1 @ params["fc2_w"].T + params["fc2_b"]
    return y @ params["fc_w"].T + params["fc_b"]


if __name__ == "__main__":
    key = jax.random.PRNGKey(0)
    k_x, k_p = jax.random.split(key)

    B, T = 2, 8
    x = jax.random.normal(k_x, (B, T, INPUT_DIM), dtype=jnp.float32)
    params = init_params(k_p)
    packed = pack_params(params)           # one-time kernel-layout packing

    out = baseline_gru_forward(x, packed)
    jax.block_until_ready(out)

    ref = _reference_forward(x, params)
    assert out.shape == (B, OUTPUT_DIM), out.shape
    # Kernel uses bf16 weights / matmul operands with f32 accumulation, so the
    # check vs the f32 reference is correspondingly relaxed.
    assert jnp.allclose(out, ref, atol=2e-2, rtol=2e-2), (out, ref)

    print("KERNEL_OK")
</pallas_src>

<mosaic_0001>
module attributes {stable_mosaic.version = 11 : i64} {
  func.func @_gru_fc_kernel(%arg0: memref<16x4xbf16, #tpu.memory_space<vmem>>, %arg1: memref<4x96xbf16, #tpu.memory_space<vmem>>, %arg2: memref<1x96xf32, #tpu.memory_space<vmem>>, %arg3: memref<32x96xbf16, #tpu.memory_space<vmem>>, %arg4: memref<1x96xf32, #tpu.memory_space<vmem>>, %arg5: memref<64x192xbf16, #tpu.memory_space<vmem>>, %arg6: memref<1x64xf32, #tpu.memory_space<vmem>>, %arg7: memref<1x32xf32, #tpu.memory_space<vmem>>, %arg8: memref<1x1xf32, #tpu.memory_space<vmem>>, %arg9: memref<2x1xf32, #tpu.memory_space<vmem>>) attributes {dimension_semantics = [], scalar_prefetch = 0 : i64, scratch_operands = 0 : i64, tpu.core_type = #tpu.core_type<tc>} {
    %c0 = arith.constant 0 : index
    %c0_0 = arith.constant 0 : index
    %0 = vector.load %arg3[%c0, %c0_0] : memref<32x96xbf16, #tpu.memory_space<vmem>>, vector<32x96xbf16>
    %c0_1 = arith.constant 0 : index
    %c0_2 = arith.constant 0 : index
    %1 = vector.load %arg4[%c0_1, %c0_2] : memref<1x96xf32, #tpu.memory_space<vmem>>, vector<1x96xf32>
    %c0_3 = arith.constant 0 : index
    %c0_4 = arith.constant 0 : index
    %2 = vector.load %arg5[%c0_3, %c0_4] : memref<64x192xbf16, #tpu.memory_space<vmem>>, vector<64x192xbf16>
    %c0_5 = arith.constant 0 : index
    %c0_6 = arith.constant 0 : index
    %3 = vector.load %arg6[%c0_5, %c0_6] : memref<1x64xf32, #tpu.memory_space<vmem>>, vector<1x64xf32>
    %4 = vector.extract_strided_slice %3 {offsets = [0, 0], sizes = [1, 32], strides = [1, 1]} : vector<1x64xf32> to vector<1x32xf32>
    %5 = vector.extract_strided_slice %3 {offsets = [0, 32], sizes = [1, 32], strides = [1, 1]} : vector<1x64xf32> to vector<1x32xf32>
    %c0_7 = arith.constant 0 : index
    %c0_8 = arith.constant 0 : index
    %6 = vector.load %arg0[%c0_7, %c0_8] : memref<16x4xbf16, #tpu.memory_space<vmem>>, vector<16x4xbf16>
    %c0_9 = arith.constant 0 : index
    %c0_10 = arith.constant 0 : index
    %7 = vector.load %arg1[%c0_9, %c0_10] : memref<4x96xbf16, #tpu.memory_space<vmem>>, vector<4x96xbf16>
    %cst = arith.constant dense<0.000000e+00> : vector<16x96xf32>
    %8 = tpu.matmul %6, %7, %cst {dimension_numbers = #tpu.dot_dimension_numbers<[1], [0], [0], [1], [0, 0, 1, 1], [], []>} : vector<16x4xbf16>, vector<4x96xbf16>, vector<16x96xf32> -> vector<16x96xf32>
    %c0_11 = arith.constant 0 : index
    %c0_12 = arith.constant 0 : index
    %9 = vector.load %arg2[%c0_11, %c0_12] : memref<1x96xf32, #tpu.memory_space<vmem>>, vector<1x96xf32>
    %10 = vector.broadcast %9 : vector<1x96xf32> to vector<16x96xf32>
    %11 = arith.addf %8, %10 : vector<16x96xf32>
    %cst_13 = arith.constant 0.000000e+00 : f32
    %12 = vector.broadcast %cst_13 : f32 to vector<2x32xf32>
    %cst_14 = arith.constant 0.000000e+00 : f32
    %13 = vector.broadcast %cst_14 : f32 to vector<2x32xf32>
    %cst_15 = arith.constant 0.000000e+00 : bf16
    %14 = vector.broadcast %cst_15 : bf16 to vector<2x64xbf16>
    %cst_16 = arith.constant dense<0.000000e+00> : vector<2x192xf32>
    %15 = tpu.matmul %14, %2, %cst_16 {dimension_numbers = #tpu.dot_dimension_numbers<[1], [0], [0], [1], [0, 0, 1, 1], [], []>} : vector<2x64xbf16>, vector<64x192xbf16>, vector<2x192xf32> -> vector<2x192xf32>
    %16 = vector.extract_strided_slice %11 {offsets = [0, 0], sizes = [2, 96], strides = [1, 1]} : vector<16x96xf32> to vector<2x96xf32>
    %17 = vector.extract_strided_slice %16 {offsets = [0, 0], sizes = [2, 32], strides = [1, 1]} : vector<2x96xf32> to vector<2x32xf32>
    %18 = vector.extract_strided_slice %15 {offsets = [0, 0], sizes = [2, 32], strides = [1, 1]} : vector<2x192xf32> to vector<2x32xf32>
    %19 = arith.addf %17, %18 : vector<2x32xf32>
    %20 = arith.negf %19 : vector<2x32xf32>
    %21 = math.exp %20 : vector<2x32xf32>
    %cst_17 = arith.constant 1.000000e+00 : f32
    %22 = vector.broadcast %cst_17 : f32 to vector<2x32xf32>
    %23 = arith.addf %22, %21 : vector<2x32xf32>
    %24 = arith.divf %22, %23 : vector<2x32xf32>
    %25 = vector.extract_strided_slice %16 {offsets = [0, 32], sizes = [2, 32], strides = [1, 1]} : vector<2x96xf32> to vector<2x32xf32>
    %26 = vector.extract_strided_slice %15 {offsets = [0, 32], sizes = [2, 32], strides = [1, 1]} : vector<2x192xf32> to vector<2x32xf32>
    %27 = arith.addf %25, %26 : vector<2x32xf32>
    %28 = arith.negf %27 : vector<2x32xf32>
    %29 = math.exp %28 : vector<2x32xf32>
    %cst_18 = arith.constant 1.000000e+00 : f32
    %30 = vector.broadcast %cst_18 : f32 to vector<2x32xf32>
    %31 = arith.addf %30, %29 : vector<2x32xf32>
    %32 = arith.divf %30, %31 : vector<2x32xf32>
    %33 = vector.extract_strided_slice %16 {offsets = [0, 64], sizes = [2, 32], strides = [1, 1]} : vector<2x96xf32> to vector<2x32xf32>
    %34 = vector.extract_strided_slice %15 {offsets = [0, 64], sizes = [2, 32], strides = [1, 1]} : vector<2x192xf32> to vector<2x32xf32>
    %35 = vector.broadcast %4 : vector<1x32xf32> to vector<2x32xf32>
    %36 = arith.addf %34, %35 : vector<2x32xf32>
    %37 = arith.mulf %24, %36 : vector<2x32xf32>
    %38 = arith.addf %33, %37 : vector<2x32xf32>
    %39 = math.tanh %38 : vector<2x32xf32>
    %cst_19 = arith.constant 1.000000e+00 : f32
    %40 = vector.broadcast %cst_19 : f32 to vector<2x32xf32>
    %41 = arith.subf %40, %32 : vector<2x32xf32>
    %42 = arith.mulf %41, %39 : vector<2x32xf32>
    %43 = arith.mulf %32, %12 : vector<2x32xf32>
    %44 = arith.addf %42, %43 : vector<2x32xf32>
    %45 = arith.truncf %44 : vector<2x32xf32> to vector<2x32xbf16>
    %cst_20 = arith.constant dense<0.000000e+00> : vector<2x96xf32>
    %46 = tpu.matmul %45, %0, %cst_20 {dimension_numbers = #tpu.dot_dimension_numbers<[1], [0], [0], [1], [0, 0, 1, 1], [], []>} : vector<2x32xbf16>, vector<32x96xbf16>, vector<2x96xf32> -> vector<2x96xf32>
    %47 = vector.broadcast %1 : vector<1x96xf32> to vector<2x96xf32>
    %48 = arith.addf %46, %47 : vector<2x96xf32>
    %49 = vector.extract_strided_slice %48 {offsets = [0, 0], sizes = [2, 32], strides = [1, 1]} : vector<2x96xf32> to vector<2x32xf32>
    %50 = vector.extract_strided_slice %15 {offsets = [0, 96], sizes = [2, 32], strides = [1, 1]} : vector<2x192xf32> to vector<2x32xf32>
    %51 = arith.addf %49, %50 : vector<2x32xf32>
    %52 = arith.negf %51 : vector<2x32xf32>
    %53 = math.exp %52 : vector<2x32xf32>
    %cst_21 = arith.constant 1.000000e+00 : f32
    %54 = vector.broadcast %cst_21 : f32 to vector<2x32xf32>
    %55 = arith.addf %54, %53 : vector<2x32xf32>
    %56 = arith.divf %54, %55 : vector<2x32xf32>
    %57 = vector.extract_strided_slice %48 {offsets = [0, 32], sizes = [2, 32], strides = [1, 1]} : vector<2x96xf32> to vector<2x32xf32>
    %58 = vector.extract_strided_slice %15 {offsets = [0, 128], sizes = [2, 32], strides = [1, 1]} : vector<2x192xf32> to vector<2x32xf32>
    %59 = arith.addf %57, %58 : vector<2x32xf32>
    %60 = arith.negf %59 : vector<2x32xf32>
    %61 = math.exp %60 : vector<2x32xf32>
    %cst_22 = arith.constant 1.000000e+00 : f32
    %62 = vector.broadcast %cst_22 : f32 to vector<2x32xf32>
    %63 = arith.addf %62, %61 : vector<2x32xf32>
    %64 = arith.divf %62, %63 : vector<2x32xf32>
    %65 = vector.extract_strided_slice %48 {offsets = [0, 64], sizes = [2, 32], strides = [1, 1]} : vector<2x96xf32> to vector<2x32xf32>
    %66 = vector.extract_strided_slice %15 {offsets = [0, 160], sizes = [2, 32], strides = [1, 1]} : vector<2x192xf32> to vector<2x32xf32>
    %67 = vector.broadcast %5 : vector<1x32xf32> to vector<2x32xf32>
    %68 = arith.addf %66, %67 : vector<2x32xf32>
    %69 = arith.mulf %56, %68 : vector<2x32xf32>
    %70 = arith.addf %65, %69 : vector<2x32xf32>
    %71 = math.tanh %70 : vector<2x32xf32>
    %cst_23 = arith.constant 1.000000e+00 : f32
    %72 = vector.broadcast %cst_23 : f32 to vector<2x32xf32>
    %73 = arith.subf %72, %64 : vector<2x32xf32>
    %74 = arith.mulf %73, %71 : vector<2x32xf32>
    %75 = arith.mulf %64, %13 : vector<2x32xf32>
    %76 = arith.addf %74, %75 : vector<2x32xf32>
    %77 = arith.truncf %76 : vector<2x32xf32> to vector<2x32xbf16>
    %78 = tpu.concatenate %45, %77 in 1 : vector<2x32xbf16>, vector<2x32xbf16> -> vector<2x64xbf16>
    %cst_24 = arith.constant dense<0.000000e+00> : vector<2x192xf32>
    %79 = tpu.matmul %78, %2, %cst_24 {dimension_numbers = #tpu.dot_dimension_numbers<[1], [0], [0], [1], [0, 0, 1, 1], [], []>} : vector<2x64xbf16>, vector<64x192xbf16>, vector<2x192xf32> -> vector<2x192xf32>
    %80 = vector.extract_strided_slice %11 {offsets = [2, 0], sizes = [2, 96], strides = [1, 1]} : vector<16x96xf32> to vector<2x96xf32>
    %81 = vector.extract_strided_slice %80 {offsets = [0, 0], sizes = [2, 32], strides = [1, 1]} : vector<2x96xf32> to vector<2x32xf32>
    %82 = vector.extract_strided_slice %79 {offsets = [0, 0], sizes = [2, 32], strides = [1, 1]} : vector<2x192xf32> to vector<2x32xf32>
    %83 = arith.addf %81, %82 : vector<2x32xf32>
    %84 = arith.negf %83 : vector<2x32xf32>
    %85 = math.exp %84 : vector<2x32xf32>
    %cst_25 = arith.constant 1.000000e+00 : f32
    %86 = vector.broadcast %cst_25 : f32 to vector<2x32xf32>
    %87 = arith.addf %86, %85 : vector<2x32xf32>
    %88 = arith.divf %86, %87 : vector<2x32xf32>
    %89 = vector.extract_strided_slice %80 {offsets = [0, 32], sizes = [2, 32], strides = [1, 1]} : vector<2x96xf32> to vector<2x32xf32>
    %90 = vector.extract_strided_slice %79 {offsets = [0, 32], sizes = [2, 32], strides = [1, 1]} : vector<2x192xf32> to vector<2x32xf32>
    %91 = arith.addf %89, %90 : vector<2x32xf32>
    %92 = arith.negf %91 : vector<2x32xf32>
    %93 = math.exp %92 : vector<2x32xf32>
    %cst_26 = arith.constant 1.000000e+00 : f32
    %94 = vector.broadcast %cst_26 : f32 to vector<2x32xf32>
    %95 = arith.addf %94, %93 : vector<2x32xf32>
    %96 = arith.divf %94, %95 : vector<2x32xf32>
    %97 = vector.extract_strided_slice %80 {offsets = [0, 64], sizes = [2, 32], strides = [1, 1]} : vector<2x96xf32> to vector<2x32xf32>
    %98 = vector.extract_strided_slice %79 {offsets = [0, 64], sizes = [2, 32], strides = [1, 1]} : vector<2x192xf32> to vector<2x32xf32>
    %99 = vector.broadcast %4 : vector<1x32xf32> to vector<2x32xf32>
    %100 = arith.addf %98, %99 : vector<2x32xf32>
    %101 = arith.mulf %88, %100 : vector<2x32xf32>
    %102 = arith.addf %97, %101 : vector<2x32xf32>
    %103 = math.tanh %102 : vector<2x32xf32>
    %cst_27 = arith.constant 1.000000e+00 : f32
    %104 = vector.broadcast %cst_27 : f32 to vector<2x32xf32>
    %105 = arith.subf %104, %96 : vector<2x32xf32>
    %106 = arith.mulf %105, %103 : vector<2x32xf32>
    %107 = arith.mulf %96, %44 : vector<2x32xf32>
    %108 = arith.addf %106, %107 : vector<2x32xf32>
    %109 = arith.truncf %108 : vector<2x32xf32> to vector<2x32xbf16>
    %cst_28 = arith.constant dense<0.000000e+00> : vector<2x96xf32>
    %110 = tpu.matmul %109, %0, %cst_28 {dimension_numbers = #tpu.dot_dimension_numbers<[1], [0], [0], [1], [0, 0, 1, 1], [], []>} : vector<2x32xbf16>, vector<32x96xbf16>, vector<2x96xf32> -> vector<2x96xf32>
    %111 = vector.broadcast %1 : vector<1x96xf32> to vector<2x96xf32>
    %112 = arith.addf %110, %111 : vector<2x96xf32>
    %113 = vector.extract_strided_slice %112 {offsets = [0, 0], sizes = [2, 32], strides = [1, 1]} : vector<2x96xf32> to vector<2x32xf32>
    %114 = vector.extract_strided_slice %79 {offsets = [0, 96], sizes = [2, 32], strides = [1, 1]} : vector<2x192xf32> to vector<2x32xf32>
    %115 = arith.addf %113, %114 : vector<2x32xf32>
    %116 = arith.negf %115 : vector<2x32xf32>
    %117 = math.exp %116 : vector<2x32xf32>
    %cst_29 = arith.constant 1.000000e+00 : f32
    %118 = vector.broadcast %cst_29 : f32 to vector<2x32xf32>
    %119 = arith.addf %118, %117 : vector<2x32xf32>
    %120 = arith.divf %118, %119 : vector<2x32xf32>
    %121 = vector.extract_strided_slice %112 {offsets = [0, 32], sizes = [2, 32], strides = [1, 1]} : vector<2x96xf32> to vector<2x32xf32>
    %122 = vector.extract_strided_slice %79 {offsets = [0, 128], sizes = [2, 32], strides = [1, 1]} : vector<2x192xf32> to vector<2x32xf32>
    %123 = arith.addf %121, %122 : vector<2x32xf32>
    %124 = arith.negf %123 : vector<2x32xf32>
    %125 = math.exp %124 : vector<2x32xf32>
    %cst_30 = arith.constant 1.000000e+00 : f32
    %126 = vector.broadcast %cst_30 : f32 to vector<2x32xf32>
    %127 = arith.addf %126, %125 : vector<2x32xf32>
    %128 = arith.divf %126, %127 : vector<2x32xf32>
    %129 = vector.extract_strided_slice %112 {offsets = [0, 64], sizes = [2, 32], strides = [1, 1]} : vector<2x96xf32> to vector<2x32xf32>
    %130 = vector.extract_strided_slice %79 {offsets = [0, 160], sizes = [2, 32], strides = [1, 1]} : vector<2x192xf32> to vector<2x32xf32>
    %131 = vector.broadcast %5 : vector<1x32xf32> to vector<2x32xf32>
    %132 = arith.addf %130, %131 : vector<2x32xf32>
    %133 = arith.mulf %120, %132 : vector<2x32xf32>
    %134 = arith.addf %129, %133 : vector<2x32xf32>
    %135 = math.tanh %134 : vector<2x32xf32>
    %cst_31 = arith.constant 1.000000e+00 : f32
    %136 = vector.broadcast %cst_31 : f32 to vector<2x32xf32>
    %137 = arith.subf %136, %128 : vector<2x32xf32>
    %138 = arith.mulf %137, %135 : vector<2x32xf32>
    %139 = arith.mulf %128, %76 : vector<2x32xf32>
    %140 = arith.addf %138, %139 : vector<2x32xf32>
    %141 = arith.truncf %140 : vector<2x32xf32> to vector<2x32xbf16>
    %142 = tpu.concatenate %109, %141 in 1 : vector<2x32xbf16>, vector<2x32xbf16> -> vector<2x64xbf16>
    %cst_32 = arith.constant dense<0.000000e+00> : vector<2x192xf32>
    %143 = tpu.matmul %142, %2, %cst_32 {dimension_numbers = #tpu.dot_dimension_numbers<[1], [0], [0], [1], [0, 0, 1, 1], [], []>} : vector<2x64xbf16>, vector<64x192xbf16>, vector<2x192xf32> -> vector<2x192xf32>
    %144 = vector.extract_strided_slice %11 {offsets = [4, 0], sizes = [2, 96], strides = [1, 1]} : vector<16x96xf32> to vector<2x96xf32>
    %145 = vector.extract_strided_slice %144 {offsets = [0, 0], sizes = [2, 32], strides = [1, 1]} : vector<2x96xf32> to vector<2x32xf32>
    %146 = vector.extract_strided_slice %143 {offsets = [0, 0], sizes = [2, 32], strides = [1, 1]} : vector<2x192xf32> to vector<2x32xf32>
    %147 = arith.addf %145, %146 : vector<2x32xf32>
    %148 = arith.negf %147 : vector<2x32xf32>
    %149 = math.exp %148 : vector<2x32xf32>
    %cst_33 = arith.constant 1.000000e+00 : f32
    %150 = vector.broadcast %cst_33 : f32 to vector<2x32xf32>
    %151 = arith.addf %150, %149 : vector<2x32xf32>
    %152 = arith.divf %150, %151 : vector<2x32xf32>
    %153 = vector.extract_strided_slice %144 {offsets = [0, 32], sizes = [2, 32], strides = [1, 1]} : vector<2x96xf32> to vector<2x32xf32>
    %154 = vector.extract_strided_slice %143 {offsets = [0, 32], sizes = [2, 32], strides = [1, 1]} : vector<2x192xf32> to vector<2x32xf32>
    %155 = arith.addf %153, %154 : vector<2x32xf32>
    %156 = arith.negf %155 : vector<2x32xf32>
    %157 = math.exp %156 : vector<2x32xf32>
    %cst_34 = arith.constant 1.000000e+00 : f32
    %158 = vector.broadcast %cst_34 : f32 to vector<2x32xf32>
    %159 = arith.addf %158, %157 : vector<2x32xf32>
    %160 = arith.divf %158, %159 : vector<2x32xf32>
    %161 = vector.extract_strided_slice %144 {offsets = [0, 64], sizes = [2, 32], strides = [1, 1]} : vector<2x96xf32> to vector<2x32xf32>
    %162 = vector.extract_strided_slice %143 {offsets = [0, 64], sizes = [2, 32], strides = [1, 1]} : vector<2x192xf32> to vector<2x32xf32>
    %163 = vector.broadcast %4 : vector<1x32xf32> to vector<2x32xf32>
    %164 = arith.addf %162, %163 : vector<2x32xf32>
    %165 = arith.mulf %152, %164 : vector<2x32xf32>
    %166 = arith.addf %161, %165 : vector<2x32xf32>
    %167 = math.tanh %166 : vector<2x32xf32>
    %cst_35 = arith.constant 1.000000e+00 : f32
    %168 = vector.broadcast %cst_35 : f32 to vector<2x32xf32>
    %169 = arith.subf %168, %160 : vector<2x32xf32>
    %170 = arith.mulf %169, %167 : vector<2x32xf32>
    %171 = arith.mulf %160, %108 : vector<2x32xf32>
    %172 = arith.addf %170, %171 : vector<2x32xf32>
    %173 = arith.truncf %172 : vector<2x32xf32> to vector<2x32xbf16>
    %cst_36 = arith.constant dense<0.000000e+00> : vector<2x96xf32>
    %174 = tpu.matmul %173, %0, %cst_36 {dimension_numbers = #tpu.dot_dimension_numbers<[1], [0], [0], [1], [0, 0, 1, 1], [], []>} : vector<2x32xbf16>, vector<32x96xbf16>, vector<2x96xf32> -> vector<2x96xf32>
    %175 = vector.broadcast %1 : vector<1x96xf32> to vector<2x96xf32>
    %176 = arith.addf %174, %175 : vector<2x96xf32>
    %177 = vector.extract_strided_slice %176 {offsets = [0, 0], sizes = [2, 32], strides = [1, 1]} : vector<2x96xf32> to vector<2x32xf32>
    %178 = vector.extract_strided_slice %143 {offsets = [0, 96], sizes = [2, 32], strides = [1, 1]} : vector<2x192xf32> to vector<2x32xf32>
    %179 = arith.addf %177, %178 : vector<2x32xf32>
    %180 = arith.negf %179 : vector<2x32xf32>
    %181 = math.exp %180 : vector<2x32xf32>
    %cst_37 = arith.constant 1.000000e+00 : f32
    %182 = vector.broadcast %cst_37 : f32 to vector<2x32xf32>
    %183 = arith.addf %182, %181 : vector<2x32xf32>
    %184 = arith.divf %182, %183 : vector<2x32xf32>
    %185 = vector.extract_strided_slice %176 {offsets = [0, 32], sizes = [2, 32], strides = [1, 1]} : vector<2x96xf32> to vector<2x32xf32>
    %186 = vector.extract_strided_slice %143 {offsets = [0, 128], sizes = [2, 32], strides = [1, 1]} : vector<2x192xf32> to vector<2x32xf32>
    %187 = arith.addf %185, %186 : vector<2x32xf32>
    %188 = arith.negf %187 : vector<2x32xf32>
    %189 = math.exp %188 : vector<2x32xf32>
    %cst_38 = arith.constant 1.000000e+00 : f32
    %190 = vector.broadcast %cst_38 : f32 to vector<2x32xf32>
    %191 = arith.addf %190, %189 : vector<2x32xf32>
    %192 = arith.divf %190, %191 : vector<2x32xf32>
    %193 = vector.extract_strided_slice %176 {offsets = [0, 64], sizes = [2, 32], strides = [1, 1]} : vector<2x96xf32> to vector<2x32xf32>
    %194 = vector.extract_strided_slice %143 {offsets = [0, 160], sizes = [2, 32], strides = [1, 1]} : vector<2x192xf32> to vector<2x32xf32>
    %195 = vector.broadcast %5 : vector<1x32xf32> to vector<2x32xf32>
    %196 = arith.addf %194, %195 : vector<2x32xf32>
    %197 = arith.mulf %184, %196 : vector<2x32xf32>
    %198 = arith.addf %193, %197 : vector<2x32xf32>
    %199 = math.tanh %198 : vector<2x32xf32>
    %cst_39 = arith.constant 1.000000e+00 : f32
    %200 = vector.broadcast %cst_39 : f32 to vector<2x32xf32>
    %201 = arith.subf %200, %192 : vector<2x32xf32>
    %202 = arith.mulf %201, %199 : vector<2x32xf32>
    %203 = arith.mulf %192, %140 : vector<2x32xf32>
    %204 = arith.addf %202, %203 : vector<2x32xf32>
    %205 = arith.truncf %204 : vector<2x32xf32> to vector<2x32xbf16>
    %206 = tpu.concatenate %173, %205 in 1 : vector<2x32xbf16>, vector<2x32xbf16> -> vector<2x64xbf16>
    %cst_40 = arith.constant dense<0.000000e+00> : vector<2x192xf32>
    %207 = tpu.matmul %206, %2, %cst_40 {dimension_numbers = #tpu.dot_dimension_numbers<[1], [0], [0], [1], [0, 0, 1, 1], [], []>} : vector<2x64xbf16>, vector<64x192xbf16>, vector<2x192xf32> -> vector<2x192xf32>
    %208 = vector.extract_strided_slice %11 {offsets = [6, 0], sizes = [2, 96], strides = [1, 1]} : vector<16x96xf32> to vector<2x96xf32>
    %209 = vector.extract_strided_slice %208 {offsets = [0, 0], sizes = [2, 32], strides = [1, 1]} : vector<2x96xf32> to vector<2x32xf32>
    %210 = vector.extract_strided_slice %207 {offsets = [0, 0], sizes = [2, 32], strides = [1, 1]} : vector<2x192xf32> to vector<2x32xf32>
    %211 = arith.addf %209, %210 : vector<2x32xf32>
    %212 = arith.negf %211 : vector<2x32xf32>
    %213 = math.exp %212 : vector<2x32xf32>
    %cst_41 = arith.constant 1.000000e+00 : f32
    %214 = vector.broadcast %cst_41 : f32 to vector<2x32xf32>
    %215 = arith.addf %214, %213 : vector<2x32xf32>
    %216 = arith.divf %214, %215 : vector<2x32xf32>
    %217 = vector.extract_strided_slice %208 {offsets = [0, 32], sizes = [2, 32], strides = [1, 1]} : vector<2x96xf32> to vector<2x32xf32>
    %218 = vector.extract_strided_slice %207 {offsets = [0, 32], sizes = [2, 32], strides = [1, 1]} : vector<2x192xf32> to vector<2x32xf32>
    %219 = arith.addf %217, %218 : vector<2x32xf32>
    %220 = arith.negf %219 : vector<2x32xf32>
    %221 = math.exp %220 : vector<2x32xf32>
    %cst_42 = arith.constant 1.000000e+00 : f32
    %222 = vector.broadcast %cst_42 : f32 to vector<2x32xf32>
    %223 = arith.addf %222, %221 : vector<2x32xf32>
    %224 = arith.divf %222, %223 : vector<2x32xf32>
    %225 = vector.extract_strided_slice %208 {offsets = [0, 64], sizes = [2, 32], strides = [1, 1]} : vector<2x96xf32> to vector<2x32xf32>
    %226 = vector.extract_strided_slice %207 {offsets = [0, 64], sizes = [2, 32], strides = [1, 1]} : vector<2x192xf32> to vector<2x32xf32>
    %227 = vector.broadcast %4 : vector<1x32xf32> to vector<2x32xf32>
    %228 = arith.addf %226, %227 : vector<2x32xf32>
    %229 = arith.mulf %216, %228 : vector<2x32xf32>
    %230 = arith.addf %225, %229 : vector<2x32xf32>
    %231 = math.tanh %230 : vector<2x32xf32>
    %cst_43 = arith.constant 1.000000e+00 : f32
    %232 = vector.broadcast %cst_43 : f32 to vector<2x32xf32>
    %233 = arith.subf %232, %224 : vector<2x32xf32>
    %234 = arith.mulf %233, %231 : vector<2x32xf32>
    %235 = arith.mulf %224, %172 : vector<2x32xf32>
    %236 = arith.addf %234, %235 : vector<2x32xf32>
    %237 = arith.truncf %236 : vector<2x32xf32> to vector<2x32xbf16>
    %cst_44 = arith.constant dense<0.000000e+00> : vector<2x96xf32>
    %238 = tpu.matmul %237, %0, %cst_44 {dimension_numbers = #tpu.dot_dimension_numbers<[1], [0], [0], [1], [0, 0, 1, 1], [], []>} : vector<2x32xbf16>, vector<32x96xbf16>, vector<2x96xf32> -> vector<2x96xf32>
    %239 = vector.broadcast %1 : vector<1x96xf32> to vector<2x96xf32>
    %240 = arith.addf %238, %239 : vector<2x96xf32>
    %241 = vector.extract_strided_slice %240 {offsets = [0, 0], sizes = [2, 32], strides = [1, 1]} : vector<2x96xf32> to vector<2x32xf32>
    %242 = vector.extract_strided_slice %207 {offsets = [0, 96], sizes = [2, 32], strides = [1, 1]} : vector<2x192xf32> to vector<2x32xf32>
    %243 = arith.addf %241, %242 : vector<2x32xf32>
    %244 = arith.negf %243 : vector<2x32xf32>
    %245 = math.exp %244 : vector<2x32xf32>
    %cst_45 = arith.constant 1.000000e+00 : f32
    %246 = vector.broadcast %cst_45 : f32 to vector<2x32xf32>
    %247 = arith.addf %246, %245 : vector<2x32xf32>
    %248 = arith.divf %246, %247 : vector<2x32xf32>
    %249 = vector.extract_strided_slice %240 {offsets = [0, 32], sizes = [2, 32], strides = [1, 1]} : vector<2x96xf32> to vector<2x32xf32>
    %250 = vector.extract_strided_slice %207 {offsets = [0, 128], sizes = [2, 32], strides = [1, 1]} : vector<2x192xf32> to vector<2x32xf32>
    %251 = arith.addf %249, %250 : vector<2x32xf32>
    %252 = arith.negf %251 : vector<2x32xf32>
    %253 = math.exp %252 : vector<2x32xf32>
    %cst_46 = arith.constant 1.000000e+00 : f32
    %254 = vector.broadcast %cst_46 : f32 to vector<2x32xf32>
    %255 = arith.addf %254, %253 : vector<2x32xf32>
    %256 = arith.divf %254, %255 : vector<2x32xf32>
    %257 = vector.extract_strided_slice %240 {offsets = [0, 64], sizes = [2, 32], strides = [1, 1]} : vector<2x96xf32> to vector<2x32xf32>
    %258 = vector.extract_strided_slice %207 {offsets = [0, 160], sizes = [2, 32], strides = [1, 1]} : vector<2x192xf32> to vector<2x32xf32>
    %259 = vector.broadcast %5 : vector<1x32xf32> to vector<2x32xf32>
    %260 = arith.addf %258, %259 : vector<2x32xf32>
    %261 = arith.mulf %248, %260 : vector<2x32xf32>
    %262 = arith.addf %257, %261 : vector<2x32xf32>
    %263 = math.tanh %262 : vector<2x32xf32>
    %cst_47 = arith.constant 1.000000e+00 : f32
    %264 = vector.broadcast %cst_47 : f32 to vector<2x32xf32>
    %265 = arith.subf %264, %256 : vector<2x32xf32>
    %266 = arith.mulf %265, %263 : vector<2x32xf32>
    %267 = arith.mulf %256, %204 : vector<2x32xf32>
    %268 = arith.addf %266, %267 : vector<2x32xf32>
    %269 = arith.truncf %268 : vector<2x32xf32> to vector<2x32xbf16>
    %270 = tpu.concatenate %237, %269 in 1 : vector<2x32xbf16>, vector<2x32xbf16> -> vector<2x64xbf16>
    %cst_48 = arith.constant dense<0.000000e+00> : vector<2x192xf32>
    %271 = tpu.matmul %270, %2, %cst_48 {dimension_numbers = #tpu.dot_dimension_numbers<[1], [0], [0], [1], [0, 0, 1, 1], [], []>} : vector<2x64xbf16>, vector<64x192xbf16>, vector<2x192xf32> -> vector<2x192xf32>
    %272 = vector.extract_strided_slice %11 {offsets = [8, 0], sizes = [2, 96], strides = [1, 1]} : vector<16x96xf32> to vector<2x96xf32>
    %273 = vector.extract_strided_slice %272 {offsets = [0, 0], sizes = [2, 32], strides = [1, 1]} : vector<2x96xf32> to vector<2x32xf32>
    %274 = vector.extract_strided_slice %271 {offsets = [0, 0], sizes = [2, 32], strides = [1, 1]} : vector<2x192xf32> to vector<2x32xf32>
    %275 = arith.addf %273, %274 : vector<2x32xf32>
    %276 = arith.negf %275 : vector<2x32xf32>
    %277 = math.exp %276 : vector<2x32xf32>
    %cst_49 = arith.constant 1.000000e+00 : f32
    %278 = vector.broadcast %cst_49 : f32 to vector<2x32xf32>
    %279 = arith.addf %278, %277 : vector<2x32xf32>
    %280 = arith.divf %278, %279 : vector<2x32xf32>
    %281 = vector.extract_strided_slice %272 {offsets = [0, 32], sizes = [2, 32], strides = [1, 1]} : vector<2x96xf32> to vector<2x32xf32>
    %282 = vector.extract_strided_slice %271 {offsets = [0, 32], sizes = [2, 32], strides = [1, 1]} : vector<2x192xf32> to vector<2x32xf32>
    %283 = arith.addf %281, %282 : vector<2x32xf32>
    %284 = arith.negf %283 : vector<2x32xf32>
    %285 = math.exp %284 : vector<2x32xf32>
    %cst_50 = arith.constant 1.000000e+00 : f32
    %286 = vector.broadcast %cst_50 : f32 to vector<2x32xf32>
    %287 = arith.addf %286, %285 : vector<2x32xf32>
    %288 = arith.divf %286, %287 : vector<2x32xf32>
    %289 = vector.extract_strided_slice %272 {offsets = [0, 64], sizes = [2, 32], strides = [1, 1]} : vector<2x96xf32> to vector<2x32xf32>
    %290 = vector.extract_strided_slice %271 {offsets = [0, 64], sizes = [2, 32], strides = [1, 1]} : vector<2x192xf32> to vector<2x32xf32>
    %291 = vector.broadcast %4 : vector<1x32xf32> to vector<2x32xf32>
    %292 = arith.addf %290, %291 : vector<2x32xf32>
    %293 = arith.mulf %280, %292 : vector<2x32xf32>
    %294 = arith.addf %289, %293 : vector<2x32xf32>
    %295 = math.tanh %294 : vector<2x32xf32>
    %cst_51 = arith.constant 1.000000e+00 : f32
    %296 = vector.broadcast %cst_51 : f32 to vector<2x32xf32>
    %297 = arith.subf %296, %288 : vector<2x32xf32>
    %298 = arith.mulf %297, %295 : vector<2x32xf32>
    %299 = arith.mulf %288, %236 : vector<2x32xf32>
    %300 = arith.addf %298, %299 : vector<2x32xf32>
    %301 = arith.truncf %300 : vector<2x32xf32> to vector<2x32xbf16>
    %cst_52 = arith.constant dense<0.000000e+00> : vector<2x96xf32>
    %302 = tpu.matmul %301, %0, %cst_52 {dimension_numbers = #tpu.dot_dimension_numbers<[1], [0], [0], [1], [0, 0, 1, 1], [], []>} : vector<2x32xbf16>, vector<32x96xbf16>, vector<2x96xf32> -> vector<2x96xf32>
    %303 = vector.broadcast %1 : vector<1x96xf32> to vector<2x96xf32>
    %304 = arith.addf %302, %303 : vector<2x96xf32>
    %305 = vector.extract_strided_slice %304 {offsets = [0, 0], sizes = [2, 32], strides = [1, 1]} : vector<2x96xf32> to vector<2x32xf32>
    %306 = vector.extract_strided_slice %271 {offsets = [0, 96], sizes = [2, 32], strides = [1, 1]} : vector<2x192xf32> to vector<2x32xf32>
    %307 = arith.addf %305, %306 : vector<2x32xf32>
    %308 = arith.negf %307 : vector<2x32xf32>
    %309 = math.exp %308 : vector<2x32xf32>
    %cst_53 = arith.constant 1.000000e+00 : f32
    %310 = vector.broadcast %cst_53 : f32 to vector<2x32xf32>
    %311 = arith.addf %310, %309 : vector<2x32xf32>
    %312 = arith.divf %310, %311 : vector<2x32xf32>
    %313 = vector.extract_strided_slice %304 {offsets = [0, 32], sizes = [2, 32], strides = [1, 1]} : vector<2x96xf32> to vector<2x32xf32>
    %314 = vector.extract_strided_slice %271 {offsets = [0, 128], sizes = [2, 32], strides = [1, 1]} : vector<2x192xf32> to vector<2x32xf32>
    %315 = arith.addf %313, %314 : vector<2x32xf32>
    %316 = arith.negf %315 : vector<2x32xf32>
    %317 = math.exp %316 : vector<2x32xf32>
    %cst_54 = arith.constant 1.000000e+00 : f32
    %318 = vector.broadcast %cst_54 : f32 to vector<2x32xf32>
    %319 = arith.addf %318, %317 : vector<2x32xf32>
    %320 = arith.divf %318, %319 : vector<2x32xf32>
    %321 = vector.extract_strided_slice %304 {offsets = [0, 64], sizes = [2, 32], strides = [1, 1]} : vector<2x96xf32> to vector<2x32xf32>
    %322 = vector.extract_strided_slice %271 {offsets = [0, 160], sizes = [2, 32], strides = [1, 1]} : vector<2x192xf32> to vector<2x32xf32>
    %323 = vector.broadcast %5 : vector<1x32xf32> to vector<2x32xf32>
    %324 = arith.addf %322, %323 : vector<2x32xf32>
    %325 = arith.mulf %312, %324 : vector<2x32xf32>
    %326 = arith.addf %321, %325 : vector<2x32xf32>
    %327 = math.tanh %326 : vector<2x32xf32>
    %cst_55 = arith.constant 1.000000e+00 : f32
    %328 = vector.broadcast %cst_55 : f32 to vector<2x32xf32>
    %329 = arith.subf %328, %320 : vector<2x32xf32>
    %330 = arith.mulf %329, %327 : vector<2x32xf32>
    %331 = arith.mulf %320, %268 : vector<2x32xf32>
    %332 = arith.addf %330, %331 : vector<2x32xf32>
    %333 = arith.truncf %332 : vector<2x32xf32> to vector<2x32xbf16>
    %334 = tpu.concatenate %301, %333 in 1 : vector<2x32xbf16>, vector<2x32xbf16> -> vector<2x64xbf16>
    %cst_56 = arith.constant dense<0.000000e+00> : vector<2x192xf32>
    %335 = tpu.matmul %334, %2, %cst_56 {dimension_numbers = #tpu.dot_dimension_numbers<[1], [0], [0], [1], [0, 0, 1, 1], [], []>} : vector<2x64xbf16>, vector<64x192xbf16>, vector<2x192xf32> -> vector<2x192xf32>
    %336 = vector.extract_strided_slice %11 {offsets = [10, 0], sizes = [2, 96], strides = [1, 1]} : vector<16x96xf32> to vector<2x96xf32>
    %337 = vector.extract_strided_slice %336 {offsets = [0, 0], sizes = [2, 32], strides = [1, 1]} : vector<2x96xf32> to vector<2x32xf32>
    %338 = vector.extract_strided_slice %335 {offsets = [0, 0], sizes = [2, 32], strides = [1, 1]} : vector<2x192xf32> to vector<2x32xf32>
    %339 = arith.addf %337, %338 : vector<2x32xf32>
    %340 = arith.negf %339 : vector<2x32xf32>
    %341 = math.exp %340 : vector<2x32xf32>
    %cst_57 = arith.constant 1.000000e+00 : f32
    %342 = vector.broadcast %cst_57 : f32 to vector<2x32xf32>
    %343 = arith.addf %342, %341 : vector<2x32xf32>
    %344 = arith.divf %342, %343 : vector<2x32xf32>
    %345 = vector.extract_strided_slice %336 {offsets = [0, 32], sizes = [2, 32], strides = [1, 1]} : vector<2x96xf32> to vector<2x32xf32>
    %346 = vector.extract_strided_slice %335 {offsets = [0, 32], sizes = [2, 32], strides = [1, 1]} : vector<2x192xf32> to vector<2x32xf32>
    %347 = arith.addf %345, %346 : vector<2x32xf32>
    %348 = arith.negf %347 : vector<2x32xf32>
    %349 = math.exp %348 : vector<2x32xf32>
    %cst_58 = arith.constant 1.000000e+00 : f32
    %350 = vector.broadcast %cst_58 : f32 to vector<2x32xf32>
    %351 = arith.addf %350, %349 : vector<2x32xf32>
    %352 = arith.divf %350, %351 : vector<2x32xf32>
    %353 = vector.extract_strided_slice %336 {offsets = [0, 64], sizes = [2, 32], strides = [1, 1]} : vector<2x96xf32> to vector<2x32xf32>
    %354 = vector.extract_strided_slice %335 {offsets = [0, 64], sizes = [2, 32], strides = [1, 1]} : vector<2x192xf32> to vector<2x32xf32>
    %355 = vector.broadcast %4 : vector<1x32xf32> to vector<2x32xf32>
    %356 = arith.addf %354, %355 : vector<2x32xf32>
    %357 = arith.mulf %344, %356 : vector<2x32xf32>
    %358 = arith.addf %353, %357 : vector<2x32xf32>
    %359 = math.tanh %358 : vector<2x32xf32>
    %cst_59 = arith.constant 1.000000e+00 : f32
    %360 = vector.broadcast %cst_59 : f32 to vector<2x32xf32>
    %361 = arith.subf %360, %352 : vector<2x32xf32>
    %362 = arith.mulf %361, %359 : vector<2x32xf32>
    %363 = arith.mulf %352, %300 : vector<2x32xf32>
    %364 = arith.addf %362, %363 : vector<2x32xf32>
    %365 = arith.truncf %364 : vector<2x32xf32> to vector<2x32xbf16>
    %cst_60 = arith.constant dense<0.000000e+00> : vector<2x96xf32>
    %366 = tpu.matmul %365, %0, %cst_60 {dimension_numbers = #tpu.dot_dimension_numbers<[1], [0], [0], [1], [0, 0, 1, 1], [], []>} : vector<2x32xbf16>, vector<32x96xbf16>, vector<2x96xf32> -> vector<2x96xf32>
    %367 = vector.broadcast %1 : vector<1x96xf32> to vector<2x96xf32>
    %368 = arith.addf %366, %367 : vector<2x96xf32>
    %369 = vector.extract_strided_slice %368 {offsets = [0, 0], sizes = [2, 32], strides = [1, 1]} : vector<2x96xf32> to vector<2x32xf32>
    %370 = vector.extract_strided_slice %335 {offsets = [0, 96], sizes = [2, 32], strides = [1, 1]} : vector<2x192xf32> to vector<2x32xf32>
    %371 = arith.addf %369, %370 : vector<2x32xf32>
    %372 = arith.negf %371 : vector<2x32xf32>
    %373 = math.exp %372 : vector<2x32xf32>
    %cst_61 = arith.constant 1.000000e+00 : f32
    %374 = vector.broadcast %cst_61 : f32 to vector<2x32xf32>
    %375 = arith.addf %374, %373 : vector<2x32xf32>
    %376 = arith.divf %374, %375 : vector<2x32xf32>
    %377 = vector.extract_strided_slice %368 {offsets = [0, 32], sizes = [2, 32], strides = [1, 1]} : vector<2x96xf32> to vector<2x32xf32>
    %378 = vector.extract_strided_slice %335 {offsets = [0, 128], sizes = [2, 32], strides = [1, 1]} : vector<2x192xf32> to vector<2x32xf32>
    %379 = arith.addf %377, %378 : vector<2x32xf32>
    %380 = arith.negf %379 : vector<2x32xf32>
    %381 = math.exp %380 : vector<2x32xf32>
    %cst_62 = arith.constant 1.000000e+00 : f32
    %382 = vector.broadcast %cst_62 : f32 to vector<2x32xf32>
    %383 = arith.addf %382, %381 : vector<2x32xf32>
    %384 = arith.divf %382, %383 : vector<2x32xf32>
    %385 = vector.extract_strided_slice %368 {offsets = [0, 64], sizes = [2, 32], strides = [1, 1]} : vector<2x96xf32> to vector<2x32xf32>
    %386 = vector.extract_strided_slice %335 {offsets = [0, 160], sizes = [2, 32], strides = [1, 1]} : vector<2x192xf32> to vector<2x32xf32>
    %387 = vector.broadcast %5 : vector<1x32xf32> to vector<2x32xf32>
    %388 = arith.addf %386, %387 : vector<2x32xf32>
    %389 = arith.mulf %376, %388 : vector<2x32xf32>
    %390 = arith.addf %385, %389 : vector<2x32xf32>
    %391 = math.tanh %390 : vector<2x32xf32>
    %cst_63 = arith.constant 1.000000e+00 : f32
    %392 = vector.broadcast %cst_63 : f32 to vector<2x32xf32>
    %393 = arith.subf %392, %384 : vector<2x32xf32>
    %394 = arith.mulf %393, %391 : vector<2x32xf32>
    %395 = arith.mulf %384, %332 : vector<2x32xf32>
    %396 = arith.addf %394, %395 : vector<2x32xf32>
    %397 = arith.truncf %396 : vector<2x32xf32> to vector<2x32xbf16>
    %398 = tpu.concatenate %365, %397 in 1 : vector<2x32xbf16>, vector<2x32xbf16> -> vector<2x64xbf16>
    %cst_64 = arith.constant dense<0.000000e+00> : vector<2x192xf32>
    %399 = tpu.matmul %398, %2, %cst_64 {dimension_numbers = #tpu.dot_dimension_numbers<[1], [0], [0], [1], [0, 0, 1, 1], [], []>} : vector<2x64xbf16>, vector<64x192xbf16>, vector<2x192xf32> -> vector<2x192xf32>
    %400 = vector.extract_strided_slice %11 {offsets = [12, 0], sizes = [2, 96], strides = [1, 1]} : vector<16x96xf32> to vector<2x96xf32>
    %401 = vector.extract_strided_slice %400 {offsets = [0, 0], sizes = [2, 32], strides = [1, 1]} : vector<2x96xf32> to vector<2x32xf32>
    %402 = vector.extract_strided_slice %399 {offsets = [0, 0], sizes = [2, 32], strides = [1, 1]} : vector<2x192xf32> to vector<2x32xf32>
    %403 = arith.addf %401, %402 : vector<2x32xf32>
    %404 = arith.negf %403 : vector<2x32xf32>
    %405 = math.exp %404 : vector<2x32xf32>
    %cst_65 = arith.constant 1.000000e+00 : f32
    %406 = vector.broadcast %cst_65 : f32 to vector<2x32xf32>
    %407 = arith.addf %406, %405 : vector<2x32xf32>
    %408 = arith.divf %406, %407 : vector<2x32xf32>
    %409 = vector.extract_strided_slice %400 {offsets = [0, 32], sizes = [2, 32], strides = [1, 1]} : vector<2x96xf32> to vector<2x32xf32>
    %410 = vector.extract_strided_slice %399 {offsets = [0, 32], sizes = [2, 32], strides = [1, 1]} : vector<2x192xf32> to vector<2x32xf32>
    %411 = arith.addf %409, %410 : vector<2x32xf32>
    %412 = arith.negf %411 : vector<2x32xf32>
    %413 = math.exp %412 : vector<2x32xf32>
    %cst_66 = arith.constant 1.000000e+00 : f32
    %414 = vector.broadcast %cst_66 : f32 to vector<2x32xf32>
    %415 = arith.addf %414, %413 : vector<2x32xf32>
    %416 = arith.divf %414, %415 : vector<2x32xf32>
    %417 = vector.extract_strided_slice %400 {offsets = [0, 64], sizes = [2, 32], strides = [1, 1]} : vector<2x96xf32> to vector<2x32xf32>
    %418 = vector.extract_strided_slice %399 {offsets = [0, 64], sizes = [2, 32], strides = [1, 1]} : vector<2x192xf32> to vector<2x32xf32>
    %419 = vector.broadcast %4 : vector<1x32xf32> to vector<2x32xf32>
    %420 = arith.addf %418, %419 : vector<2x32xf32>
    %421 = arith.mulf %408, %420 : vector<2x32xf32>
    %422 = arith.addf %417, %421 : vector<2x32xf32>
    %423 = math.tanh %422 : vector<2x32xf32>
    %cst_67 = arith.constant 1.000000e+00 : f32
    %424 = vector.broadcast %cst_67 : f32 to vector<2x32xf32>
    %425 = arith.subf %424, %416 : vector<2x32xf32>
    %426 = arith.mulf %425, %423 : vector<2x32xf32>
    %427 = arith.mulf %416, %364 : vector<2x32xf32>
    %428 = arith.addf %426, %427 : vector<2x32xf32>
    %429 = arith.truncf %428 : vector<2x32xf32> to vector<2x32xbf16>
    %cst_68 = arith.constant dense<0.000000e+00> : vector<2x96xf32>
    %430 = tpu.matmul %429, %0, %cst_68 {dimension_numbers = #tpu.dot_dimension_numbers<[1], [0], [0], [1], [0, 0, 1, 1], [], []>} : vector<2x32xbf16>, vector<32x96xbf16>, vector<2x96xf32> -> vector<2x96xf32>
    %431 = vector.broadcast %1 : vector<1x96xf32> to vector<2x96xf32>
    %432 = arith.addf %430, %431 : vector<2x96xf32>
    %433 = vector.extract_strided_slice %432 {offsets = [0, 0], sizes = [2, 32], strides = [1, 1]} : vector<2x96xf32> to vector<2x32xf32>
    %434 = vector.extract_strided_slice %399 {offsets = [0, 96], sizes = [2, 32], strides = [1, 1]} : vector<2x192xf32> to vector<2x32xf32>
    %435 = arith.addf %433, %434 : vector<2x32xf32>
    %436 = arith.negf %435 : vector<2x32xf32>
    %437 = math.exp %436 : vector<2x32xf32>
    %cst_69 = arith.constant 1.000000e+00 : f32
    %438 = vector.broadcast %cst_69 : f32 to vector<2x32xf32>
    %439 = arith.addf %438, %437 : vector<2x32xf32>
    %440 = arith.divf %438, %439 : vector<2x32xf32>
    %441 = vector.extract_strided_slice %432 {offsets = [0, 32], sizes = [2, 32], strides = [1, 1]} : vector<2x96xf32> to vector<2x32xf32>
    %442 = vector.extract_strided_slice %399 {offsets = [0, 128], sizes = [2, 32], strides = [1, 1]} : vector<2x192xf32> to vector<2x32xf32>
    %443 = arith.addf %441, %442 : vector<2x32xf32>
    %444 = arith.negf %443 : vector<2x32xf32>
    %445 = math.exp %444 : vector<2x32xf32>
    %cst_70 = arith.constant 1.000000e+00 : f32
    %446 = vector.broadcast %cst_70 : f32 to vector<2x32xf32>
    %447 = arith.addf %446, %445 : vector<2x32xf32>
    %448 = arith.divf %446, %447 : vector<2x32xf32>
    %449 = vector.extract_strided_slice %432 {offsets = [0, 64], sizes = [2, 32], strides = [1, 1]} : vector<2x96xf32> to vector<2x32xf32>
    %450 = vector.extract_strided_slice %399 {offsets = [0, 160], sizes = [2, 32], strides = [1, 1]} : vector<2x192xf32> to vector<2x32xf32>
    %451 = vector.broadcast %5 : vector<1x32xf32> to vector<2x32xf32>
    %452 = arith.addf %450, %451 : vector<2x32xf32>
    %453 = arith.mulf %440, %452 : vector<2x32xf32>
    %454 = arith.addf %449, %453 : vector<2x32xf32>
    %455 = math.tanh %454 : vector<2x32xf32>
    %cst_71 = arith.constant 1.000000e+00 : f32
    %456 = vector.broadcast %cst_71 : f32 to vector<2x32xf32>
    %457 = arith.subf %456, %448 : vector<2x32xf32>
    %458 = arith.mulf %457, %455 : vector<2x32xf32>
    %459 = arith.mulf %448, %396 : vector<2x32xf32>
    %460 = arith.addf %458, %459 : vector<2x32xf32>
    %461 = arith.truncf %460 : vector<2x32xf32> to vector<2x32xbf16>
    %462 = tpu.concatenate %429, %461 in 1 : vector<2x32xbf16>, vector<2x32xbf16> -> vector<2x64xbf16>
    %cst_72 = arith.constant dense<0.000000e+00> : vector<2x192xf32>
    %463 = tpu.matmul %462, %2, %cst_72 {dimension_numbers = #tpu.dot_dimension_numbers<[1], [0], [0], [1], [0, 0, 1, 1], [], []>} : vector<2x64xbf16>, vector<64x192xbf16>, vector<2x192xf32> -> vector<2x192xf32>
    %464 = vector.extract_strided_slice %11 {offsets = [14, 0], sizes = [2, 96], strides = [1, 1]} : vector<16x96xf32> to vector<2x96xf32>
    %465 = vector.extract_strided_slice %464 {offsets = [0, 0], sizes = [2, 32], strides = [1, 1]} : vector<2x96xf32> to vector<2x32xf32>
    %466 = vector.extract_strided_slice %463 {offsets = [0, 0], sizes = [2, 32], strides = [1, 1]} : vector<2x192xf32> to vector<2x32xf32>
    %467 = arith.addf %465, %466 : vector<2x32xf32>
    %468 = arith.negf %467 : vector<2x32xf32>
    %469 = math.exp %468 : vector<2x32xf32>
    %cst_73 = arith.constant 1.000000e+00 : f32
    %470 = vector.broadcast %cst_73 : f32 to vector<2x32xf32>
    %471 = arith.addf %470, %469 : vector<2x32xf32>
    %472 = arith.divf %470, %471 : vector<2x32xf32>
    %473 = vector.extract_strided_slice %464 {offsets = [0, 32], sizes = [2, 32], strides = [1, 1]} : vector<2x96xf32> to vector<2x32xf32>
    %474 = vector.extract_strided_slice %463 {offsets = [0, 32], sizes = [2, 32], strides = [1, 1]} : vector<2x192xf32> to vector<2x32xf32>
    %475 = arith.addf %473, %474 : vector<2x32xf32>
    %476 = arith.negf %475 : vector<2x32xf32>
    %477 = math.exp %476 : vector<2x32xf32>
    %cst_74 = arith.constant 1.000000e+00 : f32
    %478 = vector.broadcast %cst_74 : f32 to vector<2x32xf32>
    %479 = arith.addf %478, %477 : vector<2x32xf32>
    %480 = arith.divf %478, %479 : vector<2x32xf32>
    %481 = vector.extract_strided_slice %464 {offsets = [0, 64], sizes = [2, 32], strides = [1, 1]} : vector<2x96xf32> to vector<2x32xf32>
    %482 = vector.extract_strided_slice %463 {offsets = [0, 64], sizes = [2, 32], strides = [1, 1]} : vector<2x192xf32> to vector<2x32xf32>
    %483 = vector.broadcast %4 : vector<1x32xf32> to vector<2x32xf32>
    %484 = arith.addf %482, %483 : vector<2x32xf32>
    %485 = arith.mulf %472, %484 : vector<2x32xf32>
    %486 = arith.addf %481, %485 : vector<2x32xf32>
    %487 = math.tanh %486 : vector<2x32xf32>
    %cst_75 = arith.constant 1.000000e+00 : f32
    %488 = vector.broadcast %cst_75 : f32 to vector<2x32xf32>
    %489 = arith.subf %488, %480 : vector<2x32xf32>
    %490 = arith.mulf %489, %487 : vector<2x32xf32>
    %491 = arith.mulf %480, %428 : vector<2x32xf32>
    %492 = arith.addf %490, %491 : vector<2x32xf32>
    %493 = arith.truncf %492 : vector<2x32xf32> to vector<2x32xbf16>
    %cst_76 = arith.constant dense<0.000000e+00> : vector<2x96xf32>
    %494 = tpu.matmul %493, %0, %cst_76 {dimension_numbers = #tpu.dot_dimension_numbers<[1], [0], [0], [1], [0, 0, 1, 1], [], []>} : vector<2x32xbf16>, vector<32x96xbf16>, vector<2x96xf32> -> vector<2x96xf32>
    %495 = vector.broadcast %1 : vector<1x96xf32> to vector<2x96xf32>
    %496 = arith.addf %494, %495 : vector<2x96xf32>
    %497 = vector.extract_strided_slice %496 {offsets = [0, 0], sizes = [2, 32], strides = [1, 1]} : vector<2x96xf32> to vector<2x32xf32>
    %498 = vector.extract_strided_slice %463 {offsets = [0, 96], sizes = [2, 32], strides = [1, 1]} : vector<2x192xf32> to vector<2x32xf32>
    %499 = arith.addf %497, %498 : vector<2x32xf32>
    %500 = arith.negf %499 : vector<2x32xf32>
    %501 = math.exp %500 : vector<2x32xf32>
    %cst_77 = arith.constant 1.000000e+00 : f32
    %502 = vector.broadcast %cst_77 : f32 to vector<2x32xf32>
    %503 = arith.addf %502, %501 : vector<2x32xf32>
    %504 = arith.divf %502, %503 : vector<2x32xf32>
    %505 = vector.extract_strided_slice %496 {offsets = [0, 32], sizes = [2, 32], strides = [1, 1]} : vector<2x96xf32> to vector<2x32xf32>
    %506 = vector.extract_strided_slice %463 {offsets = [0, 128], sizes = [2, 32], strides = [1, 1]} : vector<2x192xf32> to vector<2x32xf32>
    %507 = arith.addf %505, %506 : vector<2x32xf32>
    %508 = arith.negf %507 : vector<2x32xf32>
    %509 = math.exp %508 : vector<2x32xf32>
    %cst_78 = arith.constant 1.000000e+00 : f32
    %510 = vector.broadcast %cst_78 : f32 to vector<2x32xf32>
    %511 = arith.addf %510, %509 : vector<2x32xf32>
    %512 = arith.divf %510, %511 : vector<2x32xf32>
    %513 = vector.extract_strided_slice %496 {offsets = [0, 64], sizes = [2, 32], strides = [1, 1]} : vector<2x96xf32> to vector<2x32xf32>
    %514 = vector.extract_strided_slice %463 {offsets = [0, 160], sizes = [2, 32], strides = [1, 1]} : vector<2x192xf32> to vector<2x32xf32>
    %515 = vector.broadcast %5 : vector<1x32xf32> to vector<2x32xf32>
    %516 = arith.addf %514, %515 : vector<2x32xf32>
    %517 = arith.mulf %504, %516 : vector<2x32xf32>
    %518 = arith.addf %513, %517 : vector<2x32xf32>
    %519 = math.tanh %518 : vector<2x32xf32>
    %cst_79 = arith.constant 1.000000e+00 : f32
    %520 = vector.broadcast %cst_79 : f32 to vector<2x32xf32>
    %521 = arith.subf %520, %512 : vector<2x32xf32>
    %522 = arith.mulf %521, %519 : vector<2x32xf32>
    %523 = arith.mulf %512, %460 : vector<2x32xf32>
    %524 = arith.addf %522, %523 : vector<2x32xf32>
    %c0_80 = arith.constant 0 : index
    %c0_81 = arith.constant 0 : index
    %525 = vector.load %arg7[%c0_80, %c0_81] : memref<1x32xf32, #tpu.memory_space<vmem>>, vector<1x32xf32>
    %526 = vector.broadcast %525 : vector<1x32xf32> to vector<2x32xf32>
    %527 = arith.mulf %524, %526 : vector<2x32xf32>
    %cst_82 = arith.constant dense<0.000000e+00> : vector<2xf32>
    %528 = vector.multi_reduction <add>, %527, %cst_82 [1] : vector<2x32xf32> to vector<2xf32>
    %529 = vector.shape_cast %528 : vector<2xf32> to vector<2x1xf32>
    %c0_83 = arith.constant 0 : index
    %c0_84 = arith.constant 0 : index
    %530 = vector.load %arg8[%c0_83, %c0_84] : memref<1x1xf32, #tpu.memory_space<vmem>>, vector<1x1xf32>
    %531 = vector.broadcast %530 : vector<1x1xf32> to vector<2x1xf32>
    %532 = arith.addf %529, %531 : vector<2x1xf32>
    %c0_85 = arith.constant 0 : index
    %c0_86 = arith.constant 0 : index
    %533 = vector.load %arg9[%c0_85, %c0_86] : memref<2x1xf32, #tpu.memory_space<vmem>>, vector<2x1xf32>
    tpu.vector_store %arg9[%c0_85, %c0_86], %532 {strides = array<i32>} : memref<2x1xf32, #tpu.memory_space<vmem>>, vector<2x1xf32>,
    return
  }
}

</mosaic_0001>

<llo_original>
// kernel: baseline_gru_forward.1
$region0: #{baseline_gru_forward.1}
  #allocation0 [shape = 'u32[]', space=smem, size = 0x4, offset = 0x4, fixed_abs, tag = 'smem constant byte address 0x4 - core index']
  #allocation1 [shape = 'u32[144,128]{1,0:T(1,128)}', space=vmem, size = 0x12000, scoped, tag = 'internal scratch']
  #allocation2 [shape = 'f32[1,1]{1,0:T(1,128)S(1)}', space=vmem, size = 0x200, scoped, tag = 'scoped memory for baseline_gru_forward.1']
  %s0 = inlined_call_operand.vmem [shape: bf16[16,4], index: 0, kind: input, shape index: {}]
  %s1 = inlined_call_operand.vmem [shape: bf16[4,96], index: 1, kind: input, shape index: {}]
  %s2 = inlined_call_operand.vmem [shape: f32[1,96], index: 2, kind: input, shape index: {}]
  %s3 = inlined_call_operand.vmem [shape: bf16[32,96], index: 3, kind: input, shape index: {}]
  %s4 = inlined_call_operand.vmem [shape: f32[1,96], index: 4, kind: input, shape index: {}]
  %s5 = inlined_call_operand.hbm [shape: bf16[64,192], index: 5, kind: input, shape index: {}]
  %s6 = inlined_call_operand.vmem [shape: f32[1,64], index: 6, kind: input, shape index: {}]
  %s7 = inlined_call_operand.vmem [shape: f32[1,32], index: 7, kind: input, shape index: {}]
  %s8 = inlined_call_operand.<no memory space> [shape: f32[1,1], index: 8, kind: input, shape index: {}]
  %s9 = inlined_call_operand.vmem [shape: f32[2,1], index: 9, kind: output, shape index: {}]
  %s10 = sld [smem:[#allocation0]]
  $region50: #{baseline_gru_forward.1} parent=0
    _
  %s12 = ssub.s32 1, %s10
  %s13 = scalar_select 0, %s12, %s10
  %v14 = vstv %s8
  %15 = vst [vmem:[#allocation2] sm:$0x1] %v14
  $region1: #{baseline_gru_forward.1} parent=0
    #allocation3 [shape = 'u8[32768]{0}', space=vmem, size = 0x8000, scoped, tag = 'input window, operand 5, single buffered']
    #allocation4 [shape = 's32[1]{0}', space=sflag, size = 0x4, scoped, tag = 'scoped memory for baseline_gru_forward.1']
    %16 = vsyncpa [#allocation4], 0
    // Predicated region
    $region2: #{baseline_gru_forward.1} parent=1 // pred_check
      _
    $region3: #{baseline_gru_forward.1} parent=1 // pred_check_branch
      %18 = sbr.rel (0) target = $region5
    $region4: #{baseline_gru_forward.1} parent=1 // pred_region
      _
    $region5: #{baseline_gru_forward.1} parent=1 // pred_fallthru
      _
    // Predicated region
    $region6: #{baseline_gru_forward.1} parent=1 // pred_check
      _
    $region7: #{baseline_gru_forward.1} parent=1 // pred_check_branch
      %20 = sbr.rel (0) target = $region9
    $region8: #{baseline_gru_forward.1} parent=1 // pred_region
      _
    $region9: #{baseline_gru_forward.1} parent=1 // pred_fallthru
      _
    // Predicated region
    $region10: #{baseline_gru_forward.1} parent=1 // pred_check
      _
    $region11: #{baseline_gru_forward.1} parent=1 // pred_check_branch
      %22 = sbr.rel (0) target = $region13
    $region12: #{baseline_gru_forward.1} parent=1 // pred_region
      _
    $region13: #{baseline_gru_forward.1} parent=1 // pred_fallthru
      _
    // Predicated region
    $region14: #{baseline_gru_forward.1} parent=1 // pred_check
      _
    $region15: #{baseline_gru_forward.1} parent=1 // pred_check_branch
      %24 = sbr.rel (0) target = $region17
    $region16: #{baseline_gru_forward.1} parent=1 // pred_region
      _
    $region17: #{baseline_gru_forward.1} parent=1 // pred_fallthru
      _
    // Predicated region
    $region18: #{baseline_gru_forward.1} parent=1 // pred_check
      _
    $region19: #{baseline_gru_forward.1} parent=1 // pred_check_branch
      %26 = sbr.rel (0) target = $region21
    $region20: #{baseline_gru_forward.1} parent=1 // pred_region
      _
    $region21: #{baseline_gru_forward.1} parent=1 // pred_fallthru
      _
    // Predicated region
    $region22: #{baseline_gru_forward.1} parent=1 // pred_check
      _
    $region23: #{baseline_gru_forward.1} parent=1 // pred_check_branch
      %28 = sbr.rel (0) target = $region25
    $region24: #{baseline_gru_forward.1} parent=1 // pred_region
      %s30 = ssub.s32 1024, 1024
      %31 = vsyncadd [#allocation4], %s30
      %s32 = sshll.u32 [#allocation3], 4
      %s33 = int_to_ptr.vmem [resolvable:$true] %s32
      %38 = dma.hbm_to_vmem [thread:$0]  %s5, 1024, %s33, [#allocation4], 128, 128, 8
    $region25: #{baseline_gru_forward.1} parent=1 // pred_fallthru
      _
    // Predicated region
    $region26: #{baseline_gru_forward.1} parent=1 // pred_check
      _
    $region27: #{baseline_gru_forward.1} parent=1 // pred_check_branch
      %40 = sbr.rel (0) target = $region29
    $region28: #{baseline_gru_forward.1} parent=1 // pred_region
      _
    $region29: #{baseline_gru_forward.1} parent=1 // pred_fallthru
      _
    // Predicated region
    $region30: #{baseline_gru_forward.1} parent=1 // pred_check
      _
    $region31: #{baseline_gru_forward.1} parent=1 // pred_check_branch
      %42 = sbr.rel (0) target = $region33
    $region32: #{baseline_gru_forward.1} parent=1 // pred_region
      _
    $region33: #{baseline_gru_forward.1} parent=1 // pred_fallthru
      _
    // Predicated region
    $region34: #{baseline_gru_forward.1} parent=1 // pred_check
      _
    $region35: #{baseline_gru_forward.1} parent=1 // pred_check_branch
      %44 = sbr.rel (0) target = $region37
    $region36: #{baseline_gru_forward.1} parent=1 // pred_region
      _
    $region37: #{baseline_gru_forward.1} parent=1 // pred_fallthru
      _
    // Predicated region
    $region38: #{baseline_gru_forward.1} parent=1 // pred_check
      _
    $region39: #{baseline_gru_forward.1} parent=1 // pred_check_branch
      %46 = sbr.rel (0) target = $region41
    $region40: #{baseline_gru_forward.1} parent=1 // pred_region
      %47 = dma.done [#allocation4], 1024
    $region41: #{baseline_gru_forward.1} parent=1 // pred_fallthru
      _
    %v49 = vld [vmem:[%s3] sm:$0xf]
    %v50 = vld [vmem:[%s3 + $0x4] sm:$0xf]
    %v51 = vld [vmem:[%s3 + $0x8] sm:$0xf]
    %v52 = vld [vmem:[%s3 + $0xc] sm:$0xf]
    %v53 = vld [vmem:[%s4] sm:$0x1]
    %v54 = vld [vmem:[#allocation3] sm:$0xff]
    %v55 = vld [vmem:[#allocation3 + $0x8] sm:$0xff]
    %v56 = vld [vmem:[#allocation3 + $0x10] sm:$0xff]
    %v57 = vld [vmem:[#allocation3 + $0x18] sm:$0xff]
    %v58 = vld [vmem:[#allocation3 + $0x20] sm:$0xff]
    %v59 = vld [vmem:[#allocation3 + $0x28] sm:$0xff]
    %v60 = vld [vmem:[#allocation3 + $0x30] sm:$0xff]
    %v61 = vld [vmem:[#allocation3 + $0x38] sm:$0xff]
    %v62 = vld [vmem:[%s6] sm:$0x1]
    %v63 = vld [vmem:[%s0] sm:$0xf]
    %v64 = vld [vmem:[%s0 + $0x4] sm:$0xf]
    %v65 = vld [vmem:[%s1] sm:$0x3]
    %v66 = vld [vmem:[%s2] sm:$0x1]
    %v68 = vlaneseq
    %v69 = vshrl.u32 %v68, 7
    %v70 = vsub.s32 0, %v69
    %v71 = vrot.slane %v66, %v70
    %v75 = vunpack.c.l.b16 %v63
    %v76 = vunpack.c.l.b16 %v64
    %v77 = vpack.c.b16 %v76, %v75
    %vm78 = vcmask 31744
    %v80 = vsel %vm78, %v77, 0
    %vm82 = vcmask 1041408
    %v84 = vsel %vm82, %v65, 0
    %86 = vmatprep.subr.bf16.mxu0 0
    %87 = vmatpush1.bf16.msra.mxu0 0
    %88 = vmatprep.subr.bf16.mxu0 0
    %89 = vmatpush1.bf16.msra.mxu0 0
    %90 = vmatprep.subr.bf16.mxu0 0
    %91 = vmatpush1.bf16.msra.mxu0 0
    %92 = vmatprep.subr.bf16.mxu0 0
    %93 = vmatpush1.bf16.msra.mxu0 0
    %94 = vmatprep.subr.bf16.mxu0 0
    %95 = vmatpush1.bf16.msra.mxu0 0
    %96 = vmatprep.subr.bf16.mxu0 0
    %97 = vmatpush1.bf16.msra.mxu0 0
    %98 = vmatprep.subr.bf16.mxu0 0
    %99 = vmatpush1.bf16.msra.mxu0 0
    %100 = vmatprep.subr.bf16.mxu0 0
    %101 = vmatpush1.bf16.msra.mxu0 %v84
    %102 = vmatprep.subr.bf16.mxu0 0
    %103 = vmatpush2.bf16.msra.mxu0 0
    %104 = vmatprep.subr.bf16.mxu0 0
    %105 = vmatpush2.bf16.msra.mxu0 0
    %106 = vmatprep.subr.bf16.mxu0 0
    %107 = vmatpush2.bf16.msra.mxu0 0
    %108 = vmatprep.subr.bf16.mxu0 0
    %109 = vmatpush2.bf16.msra.mxu0 0
    %110 = vmatprep.subr.bf16.mxu0 0
    %111 = vmatpush2.bf16.msra.mxu0 0
    %112 = vmatprep.subr.bf16.mxu0 0
    %113 = vmatpush2.bf16.msra.mxu0 0
    %114 = vmatprep.subr.bf16.mxu0 0
    %115 = vmatpush2.bf16.msra.mxu0 0
    %116 = vmatprep.subr.bf16.mxu0 0
    %117 = vmatpush2.bf16.msra.mxu0 0
    %118 = vmatprep.mubr.bf16.mxu0 0
    %119 = vmatmul.mubr.bf16.gmra.mxu0 %v80
    %v120 = vpop.f32.mrf.mxu0
    %v121 = vadd.f32 %v71, %v120
    %v122 = vpop.f32.mrf.mxu0
    %v123 = vpop.f32.mrf.mxu0
    %v124 = vadd.f32 %v71, %v123
    %v125 = vpop.f32.mrf.mxu0
    %126 = vdwg.mxu0
    %v135 = vunpack.c.l.b16 %v54
    %v136 = vunpack.c.h.b16 %v54
    %v137 = vunpack.c.l.b16 %v55
    %v138 = vunpack.c.h.b16 %v55
    %v139 = vunpack.c.l.b16 %v56
    %v140 = vunpack.c.h.b16 %v56
    %v141 = vunpack.c.l.b16 %v57
    %v142 = vunpack.c.h.b16 %v57
    %v143 = vunpack.c.l.b16 %v58
    %v144 = vunpack.c.h.b16 %v58
    %v145 = vunpack.c.l.b16 %v59
    %v146 = vunpack.c.h.b16 %v59
    %v147 = vunpack.c.l.b16 %v60
    %v148 = vunpack.c.h.b16 %v60
    %v149 = vunpack.c.l.b16 %v61
    %v150 = vunpack.c.h.b16 %v61
    %v151 = vpack.c.b16 %v137, %v135
    %v152 = vpack.c.b16 %v138, %v136
    %v153 = vpack.c.b16 %v141, %v139
    %v154 = vpack.c.b16 %v142, %v140
    %v155 = vpack.c.b16 %v145, %v143
    %v156 = vpack.c.b16 %v146, %v144
    %v157 = vpack.c.b16 %v149, %v147
    %v158 = vpack.c.b16 %v150, %v148
    %vm167 = vcmask 523264
    %v169 = vsel %vm167, 0, 0
    %171 = vmatprep.subr.bf16.mxu0 0
    %172 = vmatpush1.bf16.msra.mxu0 0
    %173 = vmatprep.subr.bf16.mxu0 0
    %174 = vmatpush1.bf16.msra.mxu0 0
    %175 = vmatprep.subr.bf16.mxu0 0
    %176 = vmatpush1.bf16.msra.mxu0 0
    %177 = vmatprep.subr.bf16.mxu0 0
    %178 = vmatpush1.bf16.msra.mxu0 0
    %179 = vmatprep.subr.bf16.mxu0 %v158
    %180 = vmatpush1.bf16.msra.mxu0 %v157
    %181 = vmatprep.subr.bf16.mxu0 %v156
    %182 = vmatpush1.bf16.msra.mxu0 %v155
    %183 = vmatprep.subr.bf16.mxu0 %v154
    %184 = vmatpush1.bf16.msra.mxu0 %v153
    %185 = vmatprep.subr.bf16.mxu0 %v152
    %186 = vmatpush1.bf16.msra.mxu0 %v151
    %187 = vmatprep.subr.bf16.mxu0 0
    %188 = vmatpush2.bf16.msra.mxu0 0
    %189 = vmatprep.subr.bf16.mxu0 0
    %190 = vmatpush2.bf16.msra.mxu0 0
    %191 = vmatprep.subr.bf16.mxu0 0
    %192 = vmatpush2.bf16.msra.mxu0 0
    %193 = vmatprep.subr.bf16.mxu0 0
    %194 = vmatpush2.bf16.msra.mxu0 0
    %195 = vmatprep.subr.bf16.mxu0 0
    %196 = vmatpush2.bf16.msra.mxu0 0
    %197 = vmatprep.subr.bf16.mxu0 0
    %198 = vmatpush2.bf16.msra.mxu0 0
    %199 = vmatprep.subr.bf16.mxu0 0
    %200 = vmatpush2.bf16.msra.mxu0 0
    %201 = vmatprep.subr.bf16.mxu0 0
    %202 = vmatpush2.bf16.msra.mxu0 0
    %203 = vmatprep.mubr.bf16.mxu0 0
    %204 = vmatmul.mubr.bf16.gmra.mxu0 %v169
    %v205 = vpop.f32.mrf.mxu0
    %v206 = vadd.f32 0.0, %v205
    %v207 = vpop.f32.mrf.mxu0
    %v208 = vadd.f32 0.0, %v207
    %v209 = vpop.f32.mrf.mxu0
    %v210 = vpop.f32.mrf.mxu0
    %211 = vdwg.mxu0
    %v212 = vadd.f32 %v121, %v206
    %v213 = vxor.u32 %v212, 2147483648
    %v214 = vmul.f32 %v213, 1.442695
    %v215 = vpow.pop %v214
    %v216 = vadd.f32 %v215, 1.0
    %v217 = vrcp.pop %v216
    %v218 = vmul.f32 1.0, %v217
    %v220 = vlaneseq
    %v221 = vshrl.u32 %v220, 7
    %v222 = vsub.s32 0, %v221
    %v223 = vrot.slane %v62, %v222
    %224 = vrot.lane.b32.xlu0 %v223, 64
    %v225 = vpop.permute.xlu0 %224
    %v227 = vadd.f32 %v206, %v225
    %229 = vrot.lane.b32.xlu0 %v227, 64
    %v230 = vpop.permute.xlu0 %229
    %v232 = vmul.f32 %v218, %v230
    %234 = vrot.lane.b32.xlu0 %v232, 64
    %v235 = vpop.permute.xlu0 %234
    %v237 = vadd.f32 %v121, %v235
    %v238 = vtanh.pop %v237
    %v239 = vsub.f32 1.0, %v218
    %241 = vrot.lane.b32.xlu0 %v238, 96
    %v242 = vpop.permute.xlu0 %241
    %v244 = vmul.f32 %v239, %v242
    %v245 = vmul.f32 %v218, 0.0
    %v246 = vadd.f32 %v244, %v245
    %v247 = vpack.c.bf16 %v246, %v246
    %v249 = vlaneseq
    %v250 = vshrl.u32 %v249, 7
    %v251 = vsub.s32 0, %v250
    %v252 = vrot.slane %v53, %v251
    %255 = vrot.lane.b32.xlu0 %v247, 96
    %v256 = vpop.permute.xlu0 %255
    %v261 = vunpack.c.l.b16 %v49
    %v262 = vunpack.c.l.b16 %v50
    %v263 = vunpack.c.l.b16 %v51
    %v264 = vunpack.c.l.b16 %v52
    %v265 = vpack.c.b16 %v262, %v261
    %v266 = vpack.c.b16 %v264, %v263
    %vm269 = vcmask 261120
    %v271 = vsel %vm269, %v256, 0
    %273 = vmatprep.subr.bf16.mxu0 0
    %274 = vmatpush1.bf16.msra.mxu0 0
    %275 = vmatprep.subr.bf16.mxu0 0
    %276 = vmatpush1.bf16.msra.mxu0 0
    %277 = vmatprep.subr.bf16.mxu0 0
    %278 = vmatpush1.bf16.msra.mxu0 0
    %279 = vmatprep.subr.bf16.mxu0 0
    %280 = vmatpush1.bf16.msra.mxu0 0
    %281 = vmatprep.subr.bf16.mxu0 0
    %282 = vmatpush1.bf16.msra.mxu0 0
    %283 = vmatprep.subr.bf16.mxu0 0
    %284 = vmatpush1.bf16.msra.mxu0 0
    %285 = vmatprep.subr.bf16.mxu0 0
    %286 = vmatpush1.bf16.msra.mxu0 %v266
    %287 = vmatprep.subr.bf16.mxu0 0
    %288 = vmatpush1.bf16.msra.mxu0 %v265
    %289 = vmatprep.subr.bf16.mxu0 0
    %290 = vmatpush2.bf16.msra.mxu0 0
    %291 = vmatprep.subr.bf16.mxu0 0
    %292 = vmatpush2.bf16.msra.mxu0 0
    %293 = vmatprep.subr.bf16.mxu0 0
    %294 = vmatpush2.bf16.msra.mxu0 0
    %295 = vmatprep.subr.bf16.mxu0 0
    %296 = vmatpush2.bf16.msra.mxu0 0
    %297 = vmatprep.subr.bf16.mxu0 0
    %298 = vmatpush2.bf16.msra.mxu0 0
    %299 = vmatprep.subr.bf16.mxu0 0
    %300 = vmatpush2.bf16.msra.mxu0 0
    %301 = vmatprep.subr.bf16.mxu0 0
    %302 = vmatpush2.bf16.msra.mxu0 0
    %303 = vmatprep.subr.bf16.mxu0 0
    %304 = vmatpush2.bf16.msra.mxu0 0
    %305 = vmatprep.mubr.bf16.mxu0 0
    %306 = vmatmul.mubr.bf16.gmra.mxu0 %v271
    %v307 = vpop.f32.mrf.mxu0
    %v308 = vadd.f32 %v252, %v307
    %v309 = vpop.f32.mrf.mxu0
    %v310 = vpop.f32.mrf.mxu0
    %v311 = vpop.f32.mrf.mxu0
    %312 = vdwg.mxu0
    %314 = vrot.lane.b32.xlu0 %v206, 32
    %v315 = vpop.permute.xlu0 %314
    %v317 = vadd.f32 %v308, %v315
    %v318 = vxor.u32 %v317, 2147483648
    %v319 = vmul.f32 %v318, 1.442695
    %v320 = vpow.pop %v319
    %v321 = vadd.f32 %v320, 1.0
    %v322 = vrcp.pop %v321
    %v323 = vmul.f32 1.0, %v322
    %325 = vrot.lane.b32.xlu0 %v208, 32
    %v326 = vpop.permute.xlu0 %325
    %v328 = vadd.f32 %v308, %v326
    %v329 = vxor.u32 %v328, 2147483648
    %v330 = vmul.f32 %v329, 1.442695
    %v331 = vpow.pop %v330
    %v332 = vadd.f32 %v331, 1.0
    %v333 = vrcp.pop %v332
    %v334 = vmul.f32 1.0, %v333
    %v336 = vadd.f32 %v208, %v223
    %338 = vrot.lane.b32.xlu0 %v336, 96
    %v339 = vpop.permute.xlu0 %338
    %v341 = vmul.f32 %v323, %v339
    %343 = vrot.lane.b32.xlu0 %v341, 64
    %v344 = vpop.permute.xlu0 %343
    %v346 = vadd.f32 %v308, %v344
    %v347 = vtanh.pop %v346
    %v348 = vsub.f32 1.0, %v334
    %350 = vrot.lane.b32.xlu0 %v347, 96
    %v351 = vpop.permute.xlu0 %350
    %v353 = vmul.f32 %v348, %v351
    %v354 = vmul.f32 %v334, 0.0
    %v355 = vadd.f32 %v353, %v354
    %v356 = vpack.c.bf16 %v355, %v355
    %v358 = vsel %vm269, %v256, %v356
    %v359 = vsel %vm167, %v358, 0
    %361 = vmatprep.subr.bf16.mxu0 0
    %362 = vmatpush1.bf16.msra.mxu0 0
    %363 = vmatprep.subr.bf16.mxu0 0
    %364 = vmatpush1.bf16.msra.mxu0 0
    %365 = vmatprep.subr.bf16.mxu0 0
    %366 = vmatpush1.bf16.msra.mxu0 0
    %367 = vmatprep.subr.bf16.mxu0 0
    %368 = vmatpush1.bf16.msra.mxu0 0
    %369 = vmatprep.subr.bf16.mxu0 %v158
    %370 = vmatpush1.bf16.msra.mxu0 %v157
    %371 = vmatprep.subr.bf16.mxu0 %v156
    %372 = vmatpush1.bf16.msra.mxu0 %v155
    %373 = vmatprep.subr.bf16.mxu0 %v154
    %374 = vmatpush1.bf16.msra.mxu0 %v153
    %375 = vmatprep.subr.bf16.mxu0 %v152
    %376 = vmatpush1.bf16.msra.mxu0 %v151
    %377 = vmatprep.subr.bf16.mxu0 0
    %378 = vmatpush2.bf16.msra.mxu0 0
    %379 = vmatprep.subr.bf16.mxu0 0
    %380 = vmatpush2.bf16.msra.mxu0 0
    %381 = vmatprep.subr.bf16.mxu0 0
    %382 = vmatpush2.bf16.msra.mxu0 0
    %383 = vmatprep.subr.bf16.mxu0 0
    %384 = vmatpush2.bf16.msra.mxu0 0
    %385 = vmatprep.subr.bf16.mxu0 0
    %386 = vmatpush2.bf16.msra.mxu0 0
    %387 = vmatprep.subr.bf16.mxu0 0
    %388 = vmatpush2.bf16.msra.mxu0 0
    %389 = vmatprep.subr.bf16.mxu0 0
    %390 = vmatpush2.bf16.msra.mxu0 0
    %391 = vmatprep.subr.bf16.mxu0 0
    %392 = vmatpush2.bf16.msra.mxu0 0
    %393 = vmatprep.mubr.bf16.mxu0 0
    %394 = vmatmul.mubr.bf16.gmra.mxu0 %v359
    %v395 = vpop.f32.mrf.mxu0
    %v396 = vadd.f32 0.0, %v395
    %v397 = vpop.f32.mrf.mxu0
    %v398 = vadd.f32 0.0, %v397
    %v399 = vpop.f32.mrf.mxu0
    %v400 = vpop.f32.mrf.mxu0
    %401 = vdwg.mxu0
    %v403 = vrot.slane %v396, 6
    %v405 = vadd.f32 %v121, %v403
    %v406 = vxor.u32 %v405, 2147483648
    %v407 = vmul.f32 %v406, 1.442695
    %v408 = vpow.pop %v407
    %v409 = vadd.f32 %v408, 1.0
    %v410 = vrcp.pop %v409
    %v411 = vmul.f32 1.0, %v410
    %v412 = vadd.f32 %v396, %v225
    %v414 = vrot.slane %v412, 6
    %415 = vrot.lane.b32.xlu0 %v414, 64
    %v416 = vpop.permute.xlu0 %415
    %v418 = vmul.f32 %v411, %v416
    %420 = vrot.lane.b32.xlu0 %v418, 64
    %v421 = vpop.permute.xlu0 %420
    %v423 = vadd.f32 %v121, %v421
    %v424 = vtanh.pop %v423
    %v425 = vsub.f32 1.0, %v411
    %427 = vrot.lane.b32.xlu0 %v424, 96
    %v428 = vpop.permute.xlu0 %427
    %v430 = vmul.f32 %v425, %v428
    %v432 = vrot.slane %v246, 6
    %v434 = vmul.f32 %v411, %v432
    %v435 = vadd.f32 %v430, %v434
    %v436 = vpack.c.bf16 %v435, %v435
    %v438 = vrot.slane %v436, 1
    %439 = vrot.lane.b32.xlu0 %v438, 96
    %v440 = vpop.permute.xlu0 %439
    %v442 = vsel %vm269, %v440, 0
    %444 = vmatprep.subr.bf16.mxu0 0
    %445 = vmatpush1.bf16.msra.mxu0 0
    %446 = vmatprep.subr.bf16.mxu0 0
    %447 = vmatpush1.bf16.msra.mxu0 0
    %448 = vmatprep.subr.bf16.mxu0 0
    %449 = vmatpush1.bf16.msra.mxu0 0
    %450 = vmatprep.subr.bf16.mxu0 0
    %451 = vmatpush1.bf16.msra.mxu0 0
    %452 = vmatprep.subr.bf16.mxu0 0
    %453 = vmatpush1.bf16.msra.mxu0 0
    %454 = vmatprep.subr.bf16.mxu0 0
    %455 = vmatpush1.bf16.msra.mxu0 0
    %456 = vmatprep.subr.bf16.mxu0 0
    %457 = vmatpush1.bf16.msra.mxu0 %v266
    %458 = vmatprep.subr.bf16.mxu0 0
    %459 = vmatpush1.bf16.msra.mxu0 %v265
    %460 = vmatprep.subr.bf16.mxu0 0
    %461 = vmatpush2.bf16.msra.mxu0 0
    %462 = vmatprep.subr.bf16.mxu0 0
    %463 = vmatpush2.bf16.msra.mxu0 0
    %464 = vmatprep.subr.bf16.mxu0 0
    %465 = vmatpush2.bf16.msra.mxu0 0
    %466 = vmatprep.subr.bf16.mxu0 0
    %467 = vmatpush2.bf16.msra.mxu0 0
    %468 = vmatprep.subr.bf16.mxu0 0
    %469 = vmatpush2.bf16.msra.mxu0 0
    %470 = vmatprep.subr.bf16.mxu0 0
    %471 = vmatpush2.bf16.msra.mxu0 0
    %472 = vmatprep.subr.bf16.mxu0 0
    %473 = vmatpush2.bf16.msra.mxu0 0
    %474 = vmatprep.subr.bf16.mxu0 0
    %475 = vmatpush2.bf16.msra.mxu0 0
    %476 = vmatprep.mubr.bf16.mxu0 0
    %477 = vmatmul.mubr.bf16.gmra.mxu0 %v442
    %v478 = vpop.f32.mrf.mxu0
    %v479 = vadd.f32 %v252, %v478
    %v480 = vpop.f32.mrf.mxu0
    %v481 = vpop.f32.mrf.mxu0
    %v482 = vpop.f32.mrf.mxu0
    %483 = vdwg.mxu0
    %484 = vrot.lane.b32.xlu0 %v396, 32
    %v485 = vpop.permute.xlu0 %484
    %v487 = vadd.f32 %v479, %v485
    %v488 = vxor.u32 %v487, 2147483648
    %v489 = vmul.f32 %v488, 1.442695
    %v490 = vpow.pop %v489
    %v491 = vadd.f32 %v490, 1.0
    %v492 = vrcp.pop %v491
    %v493 = vmul.f32 1.0, %v492
    %495 = vrot.lane.b32.xlu0 %v398, 32
    %v496 = vpop.permute.xlu0 %495
    %v498 = vadd.f32 %v479, %v496
    %v499 = vxor.u32 %v498, 2147483648
    %v500 = vmul.f32 %v499, 1.442695
    %v501 = vpow.pop %v500
    %v502 = vadd.f32 %v501, 1.0
    %v503 = vrcp.pop %v502
    %v504 = vmul.f32 1.0, %v503
    %v505 = vadd.f32 %v398, %v223
    %507 = vrot.lane.b32.xlu0 %v505, 96
    %v508 = vpop.permute.xlu0 %507
    %v510 = vmul.f32 %v493, %v508
    %512 = vrot.lane.b32.xlu0 %v510, 64
    %v513 = vpop.permute.xlu0 %512
    %v515 = vadd.f32 %v479, %v513
    %v516 = vtanh.pop %v515
    %v517 = vsub.f32 1.0, %v504
    %519 = vrot.lane.b32.xlu0 %v516, 96
    %v520 = vpop.permute.xlu0 %519
    %v522 = vmul.f32 %v517, %v520
    %v523 = vmul.f32 %v504, %v355
    %v524 = vadd.f32 %v522, %v523
    %v525 = vpack.c.bf16 %v524, %v524
    %526 = vrot.lane.b32.xlu0 %v436, 96
    %v527 = vpop.permute.xlu0 %526
    %v529 = vrot.slane %v525, 7
    %v532 = vsel %vm269, %v527, %v529
    %v534 = vrot.slane %v532, 1
    %v536 = vsel %vm167, %v534, 0
    %538 = vmatprep.subr.bf16.mxu0 0
    %539 = vmatpush1.bf16.msra.mxu0 0
    %540 = vmatprep.subr.bf16.mxu0 0
    %541 = vmatpush1.bf16.msra.mxu0 0
    %542 = vmatprep.subr.bf16.mxu0 0
    %543 = vmatpush1.bf16.msra.mxu0 0
    %544 = vmatprep.subr.bf16.mxu0 0
    %545 = vmatpush1.bf16.msra.mxu0 0
    %546 = vmatprep.subr.bf16.mxu0 %v158
    %547 = vmatpush1.bf16.msra.mxu0 %v157
    %548 = vmatprep.subr.bf16.mxu0 %v156
    %549 = vmatpush1.bf16.msra.mxu0 %v155
    %550 = vmatprep.subr.bf16.mxu0 %v154
    %551 = vmatpush1.bf16.msra.mxu0 %v153
    %552 = vmatprep.subr.bf16.mxu0 %v152
    %553 = vmatpush1.bf16.msra.mxu0 %v151
    %554 = vmatprep.subr.bf16.mxu0 0
    %555 = vmatpush2.bf16.msra.mxu0 0
    %556 = vmatprep.subr.bf16.mxu0 0
    %557 = vmatpush2.bf16.msra.mxu0 0
    %558 = vmatprep.subr.bf16.mxu0 0
    %559 = vmatpush2.bf16.msra.mxu0 0
    %560 = vmatprep.subr.bf16.mxu0 0
    %561 = vmatpush2.bf16.msra.mxu0 0
    %562 = vmatprep.subr.bf16.mxu0 0
    %563 = vmatpush2.bf16.msra.mxu0 0
    %564 = vmatprep.subr.bf16.mxu0 0
    %565 = vmatpush2.bf16.msra.mxu0 0
    %566 = vmatprep.subr.bf16.mxu0 0
    %567 = vmatpush2.bf16.msra.mxu0 0
    %568 = vmatprep.subr.bf16.mxu0 0
    %569 = vmatpush2.bf16.msra.mxu0 0
    %570 = vmatprep.mubr.bf16.mxu0 0
    %571 = vmatmul.mubr.bf16.gmra.mxu0 %v536
    %v572 = vpop.f32.mrf.mxu0
    %v573 = vadd.f32 0.0, %v572
    %v574 = vpop.f32.mrf.mxu0
    %v575 = vadd.f32 0.0, %v574
    %v576 = vpop.f32.mrf.mxu0
    %v577 = vpop.f32.mrf.mxu0
    %578 = vdwg.mxu0
    %v580 = vrot.slane %v573, 4
    %v582 = vadd.f32 %v121, %v580
    %v583 = vxor.u32 %v582, 2147483648
    %v584 = vmul.f32 %v583, 1.442695
    %v585 = vpow.pop %v584
    %v586 = vadd.f32 %v585, 1.0
    %v587 = vrcp.pop %v586
    %v588 = vmul.f32 1.0, %v587
    %v589 = vadd.f32 %v573, %v225
    %v591 = vrot.slane %v589, 4
    %592 = vrot.lane.b32.xlu0 %v591, 64
    %v593 = vpop.permute.xlu0 %592
    %v595 = vmul.f32 %v588, %v593
    %597 = vrot.lane.b32.xlu0 %v595, 64
    %v598 = vpop.permute.xlu0 %597
    %v600 = vadd.f32 %v121, %v598
    %v601 = vtanh.pop %v600
    %v602 = vsub.f32 1.0, %v588
    %604 = vrot.lane.b32.xlu0 %v601, 96
    %v605 = vpop.permute.xlu0 %604
    %v607 = vmul.f32 %v602, %v605
    %v609 = vrot.slane %v435, 6
    %v611 = vmul.f32 %v588, %v609
    %v612 = vadd.f32 %v607, %v611
    %v613 = vpack.c.bf16 %v612, %v612
    %v615 = vrot.slane %v613, 2
    %616 = vrot.lane.b32.xlu0 %v615, 96
    %v617 = vpop.permute.xlu0 %616
    %v619 = vsel %vm269, %v617, 0
    %621 = vmatprep.subr.bf16.mxu0 0
    %622 = vmatpush1.bf16.msra.mxu0 0
    %623 = vmatprep.subr.bf16.mxu0 0
    %624 = vmatpush1.bf16.msra.mxu0 0
    %625 = vmatprep.subr.bf16.mxu0 0
    %626 = vmatpush1.bf16.msra.mxu0 0
    %627 = vmatprep.subr.bf16.mxu0 0
    %628 = vmatpush1.bf16.msra.mxu0 0
    %629 = vmatprep.subr.bf16.mxu0 0
    %630 = vmatpush1.bf16.msra.mxu0 0
    %631 = vmatprep.subr.bf16.mxu0 0
    %632 = vmatpush1.bf16.msra.mxu0 0
    %633 = vmatprep.subr.bf16.mxu0 0
    %634 = vmatpush1.bf16.msra.mxu0 %v266
    %635 = vmatprep.subr.bf16.mxu0 0
    %636 = vmatpush1.bf16.msra.mxu0 %v265
    %637 = vmatprep.subr.bf16.mxu0 0
    %638 = vmatpush2.bf16.msra.mxu0 0
    %639 = vmatprep.subr.bf16.mxu0 0
    %640 = vmatpush2.bf16.msra.mxu0 0
    %641 = vmatprep.subr.bf16.mxu0 0
    %642 = vmatpush2.bf16.msra.mxu0 0
    %643 = vmatprep.subr.bf16.mxu0 0
    %644 = vmatpush2.bf16.msra.mxu0 0
    %645 = vmatprep.subr.bf16.mxu0 0
    %646 = vmatpush2.bf16.msra.mxu0 0
    %647 = vmatprep.subr.bf16.mxu0 0
    %648 = vmatpush2.bf16.msra.mxu0 0
    %649 = vmatprep.subr.bf16.mxu0 0
    %650 = vmatpush2.bf16.msra.mxu0 0
    %651 = vmatprep.subr.bf16.mxu0 0
    %652 = vmatpush2.bf16.msra.mxu0 0
    %653 = vmatprep.mubr.bf16.mxu0 0
    %654 = vmatmul.mubr.bf16.gmra.mxu0 %v619
    %v655 = vpop.f32.mrf.mxu0
    %v656 = vadd.f32 %v252, %v655
    %v657 = vpop.f32.mrf.mxu0
    %v658 = vpop.f32.mrf.mxu0
    %v659 = vpop.f32.mrf.mxu0
    %660 = vdwg.mxu0
    %661 = vrot.lane.b32.xlu0 %v573, 32
    %v662 = vpop.permute.xlu0 %661
    %v664 = vadd.f32 %v656, %v662
    %v665 = vxor.u32 %v664, 2147483648
    %v666 = vmul.f32 %v665, 1.442695
    %v667 = vpow.pop %v666
    %v668 = vadd.f32 %v667, 1.0
    %v669 = vrcp.pop %v668
    %v670 = vmul.f32 1.0, %v669
    %672 = vrot.lane.b32.xlu0 %v575, 32
    %v673 = vpop.permute.xlu0 %672
    %v675 = vadd.f32 %v656, %v673
    %v676 = vxor.u32 %v675, 2147483648
    %v677 = vmul.f32 %v676, 1.442695
    %v678 = vpow.pop %v677
    %v679 = vadd.f32 %v678, 1.0
    %v680 = vrcp.pop %v679
    %v681 = vmul.f32 1.0, %v680
    %v682 = vadd.f32 %v575, %v223
    %684 = vrot.lane.b32.xlu0 %v682, 96
    %v685 = vpop.permute.xlu0 %684
    %v687 = vmul.f32 %v670, %v685
    %689 = vrot.lane.b32.xlu0 %v687, 64
    %v690 = vpop.permute.xlu0 %689
    %v692 = vadd.f32 %v656, %v690
    %v693 = vtanh.pop %v692
    %v694 = vsub.f32 1.0, %v681
    %696 = vrot.lane.b32.xlu0 %v693, 96
    %v697 = vpop.permute.xlu0 %696
    %v699 = vmul.f32 %v694, %v697
    %v700 = vmul.f32 %v681, %v524
    %v701 = vadd.f32 %v699, %v700
    %v702 = vpack.c.bf16 %v701, %v701
    %703 = vrot.lane.b32.xlu0 %v613, 96
    %v704 = vpop.permute.xlu0 %703
    %v706 = vrot.slane %v702, 6
    %v709 = vsel %vm269, %v704, %v706
    %v711 = vrot.slane %v709, 2
    %v713 = vsel %vm167, %v711, 0
    %715 = vmatprep.subr.bf16.mxu0 0
    %716 = vmatpush1.bf16.msra.mxu0 0
    %717 = vmatprep.subr.bf16.mxu0 0
    %718 = vmatpush1.bf16.msra.mxu0 0
    %719 = vmatprep.subr.bf16.mxu0 0
    %720 = vmatpush1.bf16.msra.mxu0 0
    %721 = vmatprep.subr.bf16.mxu0 0
    %722 = vmatpush1.bf16.msra.mxu0 0
    %723 = vmatprep.subr.bf16.mxu0 %v158
    %724 = vmatpush1.bf16.msra.mxu0 %v157
    %725 = vmatprep.subr.bf16.mxu0 %v156
    %726 = vmatpush1.bf16.msra.mxu0 %v155
    %727 = vmatprep.subr.bf16.mxu0 %v154
    %728 = vmatpush1.bf16.msra.mxu0 %v153
    %729 = vmatprep.subr.bf16.mxu0 %v152
    %730 = vmatpush1.bf16.msra.mxu0 %v151
    %731 = vmatprep.subr.bf16.mxu0 0
    %732 = vmatpush2.bf16.msra.mxu0 0
    %733 = vmatprep.subr.bf16.mxu0 0
    %734 = vmatpush2.bf16.msra.mxu0 0
    %735 = vmatprep.subr.bf16.mxu0 0
    %736 = vmatpush2.bf16.msra.mxu0 0
    %737 = vmatprep.subr.bf16.mxu0 0
    %738 = vmatpush2.bf16.msra.mxu0 0
    %739 = vmatprep.subr.bf16.mxu0 0
    %740 = vmatpush2.bf16.msra.mxu0 0
    %741 = vmatprep.subr.bf16.mxu0 0
    %742 = vmatpush2.bf16.msra.mxu0 0
    %743 = vmatprep.subr.bf16.mxu0 0
    %744 = vmatpush2.bf16.msra.mxu0 0
    %745 = vmatprep.subr.bf16.mxu0 0
    %746 = vmatpush2.bf16.msra.mxu0 0
    %747 = vmatprep.mubr.bf16.mxu0 0
    %748 = vmatmul.mubr.bf16.gmra.mxu0 %v713
    %v749 = vpop.f32.mrf.mxu0
    %v750 = vadd.f32 0.0, %v749
    %v751 = vpop.f32.mrf.mxu0
    %v752 = vadd.f32 0.0, %v751
    %v753 = vpop.f32.mrf.mxu0
    %v754 = vpop.f32.mrf.mxu0
    %755 = vdwg.mxu0
    %v757 = vrot.slane %v750, 2
    %v759 = vadd.f32 %v121, %v757
    %v760 = vxor.u32 %v759, 2147483648
    %v761 = vmul.f32 %v760, 1.442695
    %v762 = vpow.pop %v761
    %v763 = vadd.f32 %v762, 1.0
    %v764 = vrcp.pop %v763
    %v765 = vmul.f32 1.0, %v764
    %v766 = vadd.f32 %v750, %v225
    %v768 = vrot.slane %v766, 2
    %769 = vrot.lane.b32.xlu0 %v768, 64
    %v770 = vpop.permute.xlu0 %769
    %v772 = vmul.f32 %v765, %v770
    %774 = vrot.lane.b32.xlu0 %v772, 64
    %v775 = vpop.permute.xlu0 %774
    %v777 = vadd.f32 %v121, %v775
    %v778 = vtanh.pop %v777
    %v779 = vsub.f32 1.0, %v765
    %781 = vrot.lane.b32.xlu0 %v778, 96
    %v782 = vpop.permute.xlu0 %781
    %v784 = vmul.f32 %v779, %v782
    %v786 = vrot.slane %v612, 6
    %v788 = vmul.f32 %v765, %v786
    %v789 = vadd.f32 %v784, %v788
    %v790 = vpack.c.bf16 %v789, %v789
    %v792 = vrot.slane %v790, 3
    %793 = vrot.lane.b32.xlu0 %v792, 96
    %v794 = vpop.permute.xlu0 %793
    %v796 = vsel %vm269, %v794, 0
    %798 = vmatprep.subr.bf16.mxu0 0
    %799 = vmatpush1.bf16.msra.mxu0 0
    %800 = vmatprep.subr.bf16.mxu0 0
    %801 = vmatpush1.bf16.msra.mxu0 0
    %802 = vmatprep.subr.bf16.mxu0 0
    %803 = vmatpush1.bf16.msra.mxu0 0
    %804 = vmatprep.subr.bf16.mxu0 0
    %805 = vmatpush1.bf16.msra.mxu0 0
    %806 = vmatprep.subr.bf16.mxu0 0
    %807 = vmatpush1.bf16.msra.mxu0 0
    %808 = vmatprep.subr.bf16.mxu0 0
    %809 = vmatpush1.bf16.msra.mxu0 0
    %810 = vmatprep.subr.bf16.mxu0 0
    %811 = vmatpush1.bf16.msra.mxu0 %v266
    %812 = vmatprep.subr.bf16.mxu0 0
    %813 = vmatpush1.bf16.msra.mxu0 %v265
    %814 = vmatprep.subr.bf16.mxu0 0
    %815 = vmatpush2.bf16.msra.mxu0 0
    %816 = vmatprep.subr.bf16.mxu0 0
    %817 = vmatpush2.bf16.msra.mxu0 0
    %818 = vmatprep.subr.bf16.mxu0 0
    %819 = vmatpush2.bf16.msra.mxu0 0
    %820 = vmatprep.subr.bf16.mxu0 0
    %821 = vmatpush2.bf16.msra.mxu0 0
    %822 = vmatprep.subr.bf16.mxu0 0
    %823 = vmatpush2.bf16.msra.mxu0 0
    %824 = vmatprep.subr.bf16.mxu0 0
    %825 = vmatpush2.bf16.msra.mxu0 0
    %826 = vmatprep.subr.bf16.mxu0 0
    %827 = vmatpush2.bf16.msra.mxu0 0
    %828 = vmatprep.subr.bf16.mxu0 0
    %829 = vmatpush2.bf16.msra.mxu0 0
    %830 = vmatprep.mubr.bf16.mxu0 0
    %831 = vmatmul.mubr.bf16.gmra.mxu0 %v796
    %v832 = vpop.f32.mrf.mxu0
    %v833 = vadd.f32 %v252, %v832
    %v834 = vpop.f32.mrf.mxu0
    %v835 = vpop.f32.mrf.mxu0
    %v836 = vpop.f32.mrf.mxu0
    %837 = vdwg.mxu0
    %838 = vrot.lane.b32.xlu0 %v750, 32
    %v839 = vpop.permute.xlu0 %838
    %v841 = vadd.f32 %v833, %v839
    %v842 = vxor.u32 %v841, 2147483648
    %v843 = vmul.f32 %v842, 1.442695
    %v844 = vpow.pop %v843
    %v845 = vadd.f32 %v844, 1.0
    %v846 = vrcp.pop %v845
    %v847 = vmul.f32 1.0, %v846
    %849 = vrot.lane.b32.xlu0 %v752, 32
    %v850 = vpop.permute.xlu0 %849
    %v852 = vadd.f32 %v833, %v850
    %v853 = vxor.u32 %v852, 2147483648
    %v854 = vmul.f32 %v853, 1.442695
    %v855 = vpow.pop %v854
    %v856 = vadd.f32 %v855, 1.0
    %v857 = vrcp.pop %v856
    %v858 = vmul.f32 1.0, %v857
    %v859 = vadd.f32 %v752, %v223
    %861 = vrot.lane.b32.xlu0 %v859, 96
    %v862 = vpop.permute.xlu0 %861
    %v864 = vmul.f32 %v847, %v862
    %866 = vrot.lane.b32.xlu0 %v864, 64
    %v867 = vpop.permute.xlu0 %866
    %v869 = vadd.f32 %v833, %v867
    %v870 = vtanh.pop %v869
    %v871 = vsub.f32 1.0, %v858
    %873 = vrot.lane.b32.xlu0 %v870, 96
    %v874 = vpop.permute.xlu0 %873
    %v876 = vmul.f32 %v871, %v874
    %v877 = vmul.f32 %v858, %v701
    %v878 = vadd.f32 %v876, %v877
    %v879 = vpack.c.bf16 %v878, %v878
    %880 = vrot.lane.b32.xlu0 %v790, 96
    %v881 = vpop.permute.xlu0 %880
    %v883 = vrot.slane %v879, 5
    %v886 = vsel %vm269, %v881, %v883
    %v888 = vrot.slane %v886, 3
    %v890 = vsel %vm167, %v888, 0
    %892 = vmatprep.subr.bf16.mxu0 0
    %893 = vmatpush1.bf16.msra.mxu0 0
    %894 = vmatprep.subr.bf16.mxu0 0
    %895 = vmatpush1.bf16.msra.mxu0 0
    %896 = vmatprep.subr.bf16.mxu0 0
    %897 = vmatpush1.bf16.msra.mxu0 0
    %898 = vmatprep.subr.bf16.mxu0 0
    %899 = vmatpush1.bf16.msra.mxu0 0
    %900 = vmatprep.subr.bf16.mxu0 %v158
    %901 = vmatpush1.bf16.msra.mxu0 %v157
    %902 = vmatprep.subr.bf16.mxu0 %v156
    %903 = vmatpush1.bf16.msra.mxu0 %v155
    %904 = vmatprep.subr.bf16.mxu0 %v154
    %905 = vmatpush1.bf16.msra.mxu0 %v153
    %906 = vmatprep.subr.bf16.mxu0 %v152
    %907 = vmatpush1.bf16.msra.mxu0 %v151
    %908 = vmatprep.subr.bf16.mxu0 0
    %909 = vmatpush2.bf16.msra.mxu0 0
    %910 = vmatprep.subr.bf16.mxu0 0
    %911 = vmatpush2.bf16.msra.mxu0 0
    %912 = vmatprep.subr.bf16.mxu0 0
    %913 = vmatpush2.bf16.msra.mxu0 0
    %914 = vmatprep.subr.bf16.mxu0 0
    %915 = vmatpush2.bf16.msra.mxu0 0
    %916 = vmatprep.subr.bf16.mxu0 0
    %917 = vmatpush2.bf16.msra.mxu0 0
    %918 = vmatprep.subr.bf16.mxu0 0
    %919 = vmatpush2.bf16.msra.mxu0 0
    %920 = vmatprep.subr.bf16.mxu0 0
    %921 = vmatpush2.bf16.msra.mxu0 0
    %922 = vmatprep.subr.bf16.mxu0 0
    %923 = vmatpush2.bf16.msra.mxu0 0
    %924 = vmatprep.mubr.bf16.mxu0 0
    %925 = vmatmul.mubr.bf16.gmra.mxu0 %v890
    %v926 = vpop.f32.mrf.mxu0
    %v927 = vadd.f32 0.0, %v926
    %v928 = vpop.f32.mrf.mxu0
    %v929 = vadd.f32 0.0, %v928
    %v930 = vpop.f32.mrf.mxu0
    %v931 = vpop.f32.mrf.mxu0
    %932 = vdwg.mxu0
    %v933 = vadd.f32 %v124, %v927
    %v934 = vxor.u32 %v933, 2147483648
    %v935 = vmul.f32 %v934, 1.442695
    %v936 = vpow.pop %v935
    %v937 = vadd.f32 %v936, 1.0
    %v938 = vrcp.pop %v937
    %v939 = vmul.f32 1.0, %v938
    %v940 = vadd.f32 %v927, %v225
    %942 = vrot.lane.b32.xlu0 %v940, 64
    %v943 = vpop.permute.xlu0 %942
    %v945 = vmul.f32 %v939, %v943
    %947 = vrot.lane.b32.xlu0 %v945, 64
    %v948 = vpop.permute.xlu0 %947
    %v950 = vadd.f32 %v124, %v948
    %v951 = vtanh.pop %v950
    %v952 = vsub.f32 1.0, %v939
    %954 = vrot.lane.b32.xlu0 %v951, 96
    %v955 = vpop.permute.xlu0 %954
    %v957 = vmul.f32 %v952, %v955
    %v959 = vrot.slane %v789, 6
    %v961 = vmul.f32 %v939, %v959
    %v962 = vadd.f32 %v957, %v961
    %v963 = vpack.c.bf16 %v962, %v962
    %965 = vrot.lane.b32.xlu0 %v963, 96
    %v966 = vpop.permute.xlu0 %965
    %v968 = vsel %vm269, %v966, 0
    %970 = vmatprep.subr.bf16.mxu0 0
    %971 = vmatpush1.bf16.msra.mxu0 0
    %972 = vmatprep.subr.bf16.mxu0 0
    %973 = vmatpush1.bf16.msra.mxu0 0
    %974 = vmatprep.subr.bf16.mxu0 0
    %975 = vmatpush1.bf16.msra.mxu0 0
    %976 = vmatprep.subr.bf16.mxu0 0
    %977 = vmatpush1.bf16.msra.mxu0 0
    %978 = vmatprep.subr.bf16.mxu0 0
    %979 = vmatpush1.bf16.msra.mxu0 0
    %980 = vmatprep.subr.bf16.mxu0 0
    %981 = vmatpush1.bf16.msra.mxu0 0
    %982 = vmatprep.subr.bf16.mxu0 0
    %983 = vmatpush1.bf16.msra.mxu0 %v266
    %984 = vmatprep.subr.bf16.mxu0 0
    %985 = vmatpush1.bf16.msra.mxu0 %v265
    %986 = vmatprep.subr.bf16.mxu0 0
    %987 = vmatpush2.bf16.msra.mxu0 0
    %988 = vmatprep.subr.bf16.mxu0 0
    %989 = vmatpush2.bf16.msra.mxu0 0
    %990 = vmatprep.subr.bf16.mxu0 0
    %991 = vmatpush2.bf16.msra.mxu0 0
    %992 = vmatprep.subr.bf16.mxu0 0
    %993 = vmatpush2.bf16.msra.mxu0 0
    %994 = vmatprep.subr.bf16.mxu0 0
    %995 = vmatpush2.bf16.msra.mxu0 0
    %996 = vmatprep.subr.bf16.mxu0 0
    %997 = vmatpush2.bf16.msra.mxu0 0
    %998 = vmatprep.subr.bf16.mxu0 0
    %999 = vmatpush2.bf16.msra.mxu0 0
    %1000 = vmatprep.subr.bf16.mxu0 0
    %1001 = vmatpush2.bf16.msra.mxu0 0
    %1002 = vmatprep.mubr.bf16.mxu0 0
    %1003 = vmatmul.mubr.bf16.gmra.mxu0 %v968
    %v1004 = vpop.f32.mrf.mxu0
    %v1005 = vadd.f32 %v252, %v1004
    %v1006 = vpop.f32.mrf.mxu0
    %v1007 = vpop.f32.mrf.mxu0
    %v1008 = vpop.f32.mrf.mxu0
    %1009 = vdwg.mxu0
    %1011 = vrot.lane.b32.xlu0 %v927, 32
    %v1012 = vpop.permute.xlu0 %1011
    %v1014 = vadd.f32 %v1005, %v1012
    %v1015 = vxor.u32 %v1014, 2147483648
    %v1016 = vmul.f32 %v1015, 1.442695
    %v1017 = vpow.pop %v1016
    %v1018 = vadd.f32 %v1017, 1.0
    %v1019 = vrcp.pop %v1018
    %v1020 = vmul.f32 1.0, %v1019
    %1022 = vrot.lane.b32.xlu0 %v929, 32
    %v1023 = vpop.permute.xlu0 %1022
    %v1025 = vadd.f32 %v1005, %v1023
    %v1026 = vxor.u32 %v1025, 2147483648
    %v1027 = vmul.f32 %v1026, 1.442695
    %v1028 = vpow.pop %v1027
    %v1029 = vadd.f32 %v1028, 1.0
    %v1030 = vrcp.pop %v1029
    %v1031 = vmul.f32 1.0, %v1030
    %v1032 = vadd.f32 %v929, %v223
    %1034 = vrot.lane.b32.xlu0 %v1032, 96
    %v1035 = vpop.permute.xlu0 %1034
    %v1037 = vmul.f32 %v1020, %v1035
    %1039 = vrot.lane.b32.xlu0 %v1037, 64
    %v1040 = vpop.permute.xlu0 %1039
    %v1042 = vadd.f32 %v1005, %v1040
    %v1043 = vtanh.pop %v1042
    %v1044 = vsub.f32 1.0, %v1031
    %1046 = vrot.lane.b32.xlu0 %v1043, 96
    %v1047 = vpop.permute.xlu0 %1046
    %v1049 = vmul.f32 %v1044, %v1047
    %v1050 = vmul.f32 %v1031, %v878
    %v1051 = vadd.f32 %v1049, %v1050
    %v1052 = vpack.c.bf16 %v1051, %v1051
    %v1054 = vsel %vm269, %v966, %v1052
    %v1055 = vsel %vm167, %v1054, 0
    %1057 = vmatprep.subr.bf16.mxu0 0
    %1058 = vmatpush1.bf16.msra.mxu0 0
    %1059 = vmatprep.subr.bf16.mxu0 0
    %1060 = vmatpush1.bf16.msra.mxu0 0
    %1061 = vmatprep.subr.bf16.mxu0 0
    %1062 = vmatpush1.bf16.msra.mxu0 0
    %1063 = vmatprep.subr.bf16.mxu0 0
    %1064 = vmatpush1.bf16.msra.mxu0 0
    %1065 = vmatprep.subr.bf16.mxu0 %v158
    %1066 = vmatpush1.bf16.msra.mxu0 %v157
    %1067 = vmatprep.subr.bf16.mxu0 %v156
    %1068 = vmatpush1.bf16.msra.mxu0 %v155
    %1069 = vmatprep.subr.bf16.mxu0 %v154
    %1070 = vmatpush1.bf16.msra.mxu0 %v153
    %1071 = vmatprep.subr.bf16.mxu0 %v152
    %1072 = vmatpush1.bf16.msra.mxu0 %v151
    %1073 = vmatprep.subr.bf16.mxu0 0
    %1074 = vmatpush2.bf16.msra.mxu0 0
    %1075 = vmatprep.subr.bf16.mxu0 0
    %1076 = vmatpush2.bf16.msra.mxu0 0
    %1077 = vmatprep.subr.bf16.mxu0 0
    %1078 = vmatpush2.bf16.msra.mxu0 0
    %1079 = vmatprep.subr.bf16.mxu0 0
    %1080 = vmatpush2.bf16.msra.mxu0 0
    %1081 = vmatprep.subr.bf16.mxu0 0
    %1082 = vmatpush2.bf16.msra.mxu0 0
    %1083 = vmatprep.subr.bf16.mxu0 0
    %1084 = vmatpush2.bf16.msra.mxu0 0
    %1085 = vmatprep.subr.bf16.mxu0 0
    %1086 = vmatpush2.bf16.msra.mxu0 0
    %1087 = vmatprep.subr.bf16.mxu0 0
    %1088 = vmatpush2.bf16.msra.mxu0 0
    %1089 = vmatprep.mubr.bf16.mxu0 0
    %1090 = vmatmul.mubr.bf16.gmra.mxu0 %v1055
    %v1091 = vpop.f32.mrf.mxu0
    %v1092 = vadd.f32 0.0, %v1091
    %v1093 = vpop.f32.mrf.mxu0
    %v1094 = vadd.f32 0.0, %v1093
    %v1095 = vpop.f32.mrf.mxu0
    %v1096 = vpop.f32.mrf.mxu0
    %1097 = vdwg.mxu0
    %v1099 = vrot.slane %v1092, 6
    %v1101 = vadd.f32 %v124, %v1099
    %v1102 = vxor.u32 %v1101, 2147483648
    %v1103 = vmul.f32 %v1102, 1.442695
    %v1104 = vpow.pop %v1103
    %v1105 = vadd.f32 %v1104, 1.0
    %v1106 = vrcp.pop %v1105
    %v1107 = vmul.f32 1.0, %v1106
    %v1108 = vadd.f32 %v1092, %v225
    %v1110 = vrot.slane %v1108, 6
    %1111 = vrot.lane.b32.xlu0 %v1110, 64
    %v1112 = vpop.permute.xlu0 %1111
    %v1114 = vmul.f32 %v1107, %v1112
    %1116 = vrot.lane.b32.xlu0 %v1114, 64
    %v1117 = vpop.permute.xlu0 %1116
    %v1119 = vadd.f32 %v124, %v1117
    %v1120 = vtanh.pop %v1119
    %v1121 = vsub.f32 1.0, %v1107
    %1123 = vrot.lane.b32.xlu0 %v1120, 96
    %v1124 = vpop.permute.xlu0 %1123
    %v1126 = vmul.f32 %v1121, %v1124
    %v1128 = vrot.slane %v962, 6
    %v1130 = vmul.f32 %v1107, %v1128
    %v1131 = vadd.f32 %v1126, %v1130
    %v1132 = vpack.c.bf16 %v1131, %v1131
    %v1134 = vrot.slane %v1132, 1
    %1135 = vrot.lane.b32.xlu0 %v1134, 96
    %v1136 = vpop.permute.xlu0 %1135
    %v1138 = vsel %vm269, %v1136, 0
    %1140 = vmatprep.subr.bf16.mxu0 0
    %1141 = vmatpush1.bf16.msra.mxu0 0
    %1142 = vmatprep.subr.bf16.mxu0 0
    %1143 = vmatpush1.bf16.msra.mxu0 0
    %1144 = vmatprep.subr.bf16.mxu0 0
    %1145 = vmatpush1.bf16.msra.mxu0 0
    %1146 = vmatprep.subr.bf16.mxu0 0
    %1147 = vmatpush1.bf16.msra.mxu0 0
    %1148 = vmatprep.subr.bf16.mxu0 0
    %1149 = vmatpush1.bf16.msra.mxu0 0
    %1150 = vmatprep.subr.bf16.mxu0 0
    %1151 = vmatpush1.bf16.msra.mxu0 0
    %1152 = vmatprep.subr.bf16.mxu0 0
    %1153 = vmatpush1.bf16.msra.mxu0 %v266
    %1154 = vmatprep.subr.bf16.mxu0 0
    %1155 = vmatpush1.bf16.msra.mxu0 %v265
    %1156 = vmatprep.subr.bf16.mxu0 0
    %1157 = vmatpush2.bf16.msra.mxu0 0
    %1158 = vmatprep.subr.bf16.mxu0 0
    %1159 = vmatpush2.bf16.msra.mxu0 0
    %1160 = vmatprep.subr.bf16.mxu0 0
    %1161 = vmatpush2.bf16.msra.mxu0 0
    %1162 = vmatprep.subr.bf16.mxu0 0
    %1163 = vmatpush2.bf16.msra.mxu0 0
    %1164 = vmatprep.subr.bf16.mxu0 0
    %1165 = vmatpush2.bf16.msra.mxu0 0
    %1166 = vmatprep.subr.bf16.mxu0 0
    %1167 = vmatpush2.bf16.msra.mxu0 0
    %1168 = vmatprep.subr.bf16.mxu0 0
    %1169 = vmatpush2.bf16.msra.mxu0 0
    %1170 = vmatprep.subr.bf16.mxu0 0
    %1171 = vmatpush2.bf16.msra.mxu0 0
    %1172 = vmatprep.mubr.bf16.mxu0 0
    %1173 = vmatmul.mubr.bf16.gmra.mxu0 %v1138
    %v1174 = vpop.f32.mrf.mxu0
    %v1175 = vadd.f32 %v252, %v1174
    %v1176 = vpop.f32.mrf.mxu0
    %v1177 = vpop.f32.mrf.mxu0
    %v1178 = vpop.f32.mrf.mxu0
    %1179 = vdwg.mxu0
    %1180 = vrot.lane.b32.xlu0 %v1092, 32
    %v1181 = vpop.permute.xlu0 %1180
    %v1183 = vadd.f32 %v1175, %v1181
    %v1184 = vxor.u32 %v1183, 2147483648
    %v1185 = vmul.f32 %v1184, 1.442695
    %v1186 = vpow.pop %v1185
    %v1187 = vadd.f32 %v1186, 1.0
    %v1188 = vrcp.pop %v1187
    %v1189 = vmul.f32 1.0, %v1188
    %1191 = vrot.lane.b32.xlu0 %v1094, 32
    %v1192 = vpop.permute.xlu0 %1191
    %v1194 = vadd.f32 %v1175, %v1192
    %v1195 = vxor.u32 %v1194, 2147483648
    %v1196 = vmul.f32 %v1195, 1.442695
    %v1197 = vpow.pop %v1196
    %v1198 = vadd.f32 %v1197, 1.0
    %v1199 = vrcp.pop %v1198
    %v1200 = vmul.f32 1.0, %v1199
    %v1201 = vadd.f32 %v1094, %v223
    %1203 = vrot.lane.b32.xlu0 %v1201, 96
    %v1204 = vpop.permute.xlu0 %1203
    %v1206 = vmul.f32 %v1189, %v1204
    %1208 = vrot.lane.b32.xlu0 %v1206, 64
    %v1209 = vpop.permute.xlu0 %1208
    %v1211 = vadd.f32 %v1175, %v1209
    %v1212 = vtanh.pop %v1211
    %v1213 = vsub.f32 1.0, %v1200
    %1215 = vrot.lane.b32.xlu0 %v1212, 96
    %v1216 = vpop.permute.xlu0 %1215
    %v1218 = vmul.f32 %v1213, %v1216
    %v1219 = vmul.f32 %v1200, %v1051
    %v1220 = vadd.f32 %v1218, %v1219
    %v1221 = vpack.c.bf16 %v1220, %v1220
    %1222 = vrot.lane.b32.xlu0 %v1132, 96
    %v1223 = vpop.permute.xlu0 %1222
    %v1225 = vrot.slane %v1221, 7
    %v1228 = vsel %vm269, %v1223, %v1225
    %v1230 = vrot.slane %v1228, 1
    %v1232 = vsel %vm167, %v1230, 0
    %1234 = vmatprep.subr.bf16.mxu0 0
    %1235 = vmatpush1.bf16.msra.mxu0 0
    %1236 = vmatprep.subr.bf16.mxu0 0
    %1237 = vmatpush1.bf16.msra.mxu0 0
    %1238 = vmatprep.subr.bf16.mxu0 0
    %1239 = vmatpush1.bf16.msra.mxu0 0
    %1240 = vmatprep.subr.bf16.mxu0 0
    %1241 = vmatpush1.bf16.msra.mxu0 0
    %1242 = vmatprep.subr.bf16.mxu0 %v158
    %1243 = vmatpush1.bf16.msra.mxu0 %v157
    %1244 = vmatprep.subr.bf16.mxu0 %v156
    %1245 = vmatpush1.bf16.msra.mxu0 %v155
    %1246 = vmatprep.subr.bf16.mxu0 %v154
    %1247 = vmatpush1.bf16.msra.mxu0 %v153
    %1248 = vmatprep.subr.bf16.mxu0 %v152
    %1249 = vmatpush1.bf16.msra.mxu0 %v151
    %1250 = vmatprep.subr.bf16.mxu0 0
    %1251 = vmatpush2.bf16.msra.mxu0 0
    %1252 = vmatprep.subr.bf16.mxu0 0
    %1253 = vmatpush2.bf16.msra.mxu0 0
    %1254 = vmatprep.subr.bf16.mxu0 0
    %1255 = vmatpush2.bf16.msra.mxu0 0
    %1256 = vmatprep.subr.bf16.mxu0 0
    %1257 = vmatpush2.bf16.msra.mxu0 0
    %1258 = vmatprep.subr.bf16.mxu0 0
    %1259 = vmatpush2.bf16.msra.mxu0 0
    %1260 = vmatprep.subr.bf16.mxu0 0
    %1261 = vmatpush2.bf16.msra.mxu0 0
    %1262 = vmatprep.subr.bf16.mxu0 0
    %1263 = vmatpush2.bf16.msra.mxu0 0
    %1264 = vmatprep.subr.bf16.mxu0 0
    %1265 = vmatpush2.bf16.msra.mxu0 0
    %1266 = vmatprep.mubr.bf16.mxu0 0
    %1267 = vmatmul.mubr.bf16.gmra.mxu0 %v1232
    %v1268 = vpop.f32.mrf.mxu0
    %v1269 = vadd.f32 0.0, %v1268
    %v1270 = vpop.f32.mrf.mxu0
    %v1271 = vadd.f32 0.0, %v1270
    %v1272 = vpop.f32.mrf.mxu0
    %v1273 = vpop.f32.mrf.mxu0
    %1274 = vdwg.mxu0
    %v1276 = vrot.slane %v1269, 4
    %v1278 = vadd.f32 %v124, %v1276
    %v1279 = vxor.u32 %v1278, 2147483648
    %v1280 = vmul.f32 %v1279, 1.442695
    %v1281 = vpow.pop %v1280
    %v1282 = vadd.f32 %v1281, 1.0
    %v1283 = vrcp.pop %v1282
    %v1284 = vmul.f32 1.0, %v1283
    %v1285 = vadd.f32 %v1269, %v225
    %v1287 = vrot.slane %v1285, 4
    %1288 = vrot.lane.b32.xlu0 %v1287, 64
    %v1289 = vpop.permute.xlu0 %1288
    %v1291 = vmul.f32 %v1284, %v1289
    %1293 = vrot.lane.b32.xlu0 %v1291, 64
    %v1294 = vpop.permute.xlu0 %1293
    %v1296 = vadd.f32 %v124, %v1294
    %v1297 = vtanh.pop %v1296
    %v1298 = vsub.f32 1.0, %v1284
    %1300 = vrot.lane.b32.xlu0 %v1297, 96
    %v1301 = vpop.permute.xlu0 %1300
    %v1303 = vmul.f32 %v1298, %v1301
    %v1305 = vrot.slane %v1131, 6
    %v1307 = vmul.f32 %v1284, %v1305
    %v1308 = vadd.f32 %v1303, %v1307
    %v1309 = vpack.c.bf16 %v1308, %v1308
    %v1311 = vrot.slane %v1309, 2
    %1312 = vrot.lane.b32.xlu0 %v1311, 96
    %v1313 = vpop.permute.xlu0 %1312
    %v1315 = vsel %vm269, %v1313, 0
    %1317 = vmatprep.subr.bf16.mxu0 0
    %1318 = vmatpush1.bf16.msra.mxu0 0
    %1319 = vmatprep.subr.bf16.mxu0 0
    %1320 = vmatpush1.bf16.msra.mxu0 0
    %1321 = vmatprep.subr.bf16.mxu0 0
    %1322 = vmatpush1.bf16.msra.mxu0 0
    %1323 = vmatprep.subr.bf16.mxu0 0
    %1324 = vmatpush1.bf16.msra.mxu0 0
    %1325 = vmatprep.subr.bf16.mxu0 0
    %1326 = vmatpush1.bf16.msra.mxu0 0
    %1327 = vmatprep.subr.bf16.mxu0 0
    %1328 = vmatpush1.bf16.msra.mxu0 0
    %1329 = vmatprep.subr.bf16.mxu0 0
    %1330 = vmatpush1.bf16.msra.mxu0 %v266
    %1331 = vmatprep.subr.bf16.mxu0 0
    %1332 = vmatpush1.bf16.msra.mxu0 %v265
    %1333 = vmatprep.subr.bf16.mxu0 0
    %1334 = vmatpush2.bf16.msra.mxu0 0
    %1335 = vmatprep.subr.bf16.mxu0 0
    %1336 = vmatpush2.bf16.msra.mxu0 0
    %1337 = vmatprep.subr.bf16.mxu0 0
    %1338 = vmatpush2.bf16.msra.mxu0 0
    %1339 = vmatprep.subr.bf16.mxu0 0
    %1340 = vmatpush2.bf16.msra.mxu0 0
    %1341 = vmatprep.subr.bf16.mxu0 0
    %1342 = vmatpush2.bf16.msra.mxu0 0
    %1343 = vmatprep.subr.bf16.mxu0 0
    %1344 = vmatpush2.bf16.msra.mxu0 0
    %1345 = vmatprep.subr.bf16.mxu0 0
    %1346 = vmatpush2.bf16.msra.mxu0 0
    %1347 = vmatprep.subr.bf16.mxu0 0
    %1348 = vmatpush2.bf16.msra.mxu0 0
    %1349 = vmatprep.mubr.bf16.mxu0 0
    %1350 = vmatmul.mubr.bf16.gmra.mxu0 %v1315
    %v1351 = vpop.f32.mrf.mxu0
    %v1352 = vadd.f32 %v252, %v1351
    %v1353 = vpop.f32.mrf.mxu0
    %v1354 = vpop.f32.mrf.mxu0
    %v1355 = vpop.f32.mrf.mxu0
    %1356 = vdwg.mxu0
    %1357 = vrot.lane.b32.xlu0 %v1269, 32
    %v1358 = vpop.permute.xlu0 %1357
    %v1360 = vadd.f32 %v1352, %v1358
    %v1361 = vxor.u32 %v1360, 2147483648
    %v1362 = vmul.f32 %v1361, 1.442695
    %v1363 = vpow.pop %v1362
    %v1364 = vadd.f32 %v1363, 1.0
    %v1365 = vrcp.pop %v1364
    %v1366 = vmul.f32 1.0, %v1365
    %1368 = vrot.lane.b32.xlu0 %v1271, 32
    %v1369 = vpop.permute.xlu0 %1368
    %v1371 = vadd.f32 %v1352, %v1369
    %v1372 = vxor.u32 %v1371, 2147483648
    %v1373 = vmul.f32 %v1372, 1.442695
    %v1374 = vpow.pop %v1373
    %v1375 = vadd.f32 %v1374, 1.0
    %v1376 = vrcp.pop %v1375
    %v1377 = vmul.f32 1.0, %v1376
    %v1378 = vadd.f32 %v1271, %v223
    %1380 = vrot.lane.b32.xlu0 %v1378, 96
    %v1381 = vpop.permute.xlu0 %1380
    %v1383 = vmul.f32 %v1366, %v1381
    %1385 = vrot.lane.b32.xlu0 %v1383, 64
    %v1386 = vpop.permute.xlu0 %1385
    %v1388 = vadd.f32 %v1352, %v1386
    %v1389 = vtanh.pop %v1388
    %v1390 = vsub.f32 1.0, %v1377
    %1392 = vrot.lane.b32.xlu0 %v1389, 96
    %v1393 = vpop.permute.xlu0 %1392
    %v1395 = vmul.f32 %v1390, %v1393
    %v1396 = vmul.f32 %v1377, %v1220
    %v1397 = vadd.f32 %v1395, %v1396
    %v1398 = vpack.c.bf16 %v1397, %v1397
    %1399 = vrot.lane.b32.xlu0 %v1309, 96
    %v1400 = vpop.permute.xlu0 %1399
    %v1402 = vrot.slane %v1398, 6
    %v1405 = vsel %vm269, %v1400, %v1402
    %v1407 = vrot.slane %v1405, 2
    %v1409 = vsel %vm167, %v1407, 0
    %1411 = vmatprep.subr.bf16.mxu0 0
    %1412 = vmatpush1.bf16.msra.mxu0 0
    %1413 = vmatprep.subr.bf16.mxu0 0
    %1414 = vmatpush1.bf16.msra.mxu0 0
    %1415 = vmatprep.subr.bf16.mxu0 0
    %1416 = vmatpush1.bf16.msra.mxu0 0
    %1417 = vmatprep.subr.bf16.mxu0 0
    %1418 = vmatpush1.bf16.msra.mxu0 0
    %1419 = vmatprep.subr.bf16.mxu0 %v158
    %1420 = vmatpush1.bf16.msra.mxu0 %v157
    %1421 = vmatprep.subr.bf16.mxu0 %v156
    %1422 = vmatpush1.bf16.msra.mxu0 %v155
    %1423 = vmatprep.subr.bf16.mxu0 %v154
    %1424 = vmatpush1.bf16.msra.mxu0 %v153
    %1425 = vmatprep.subr.bf16.mxu0 %v152
    %1426 = vmatpush1.bf16.msra.mxu0 %v151
    %1427 = vmatprep.subr.bf16.mxu0 0
    %1428 = vmatpush2.bf16.msra.mxu0 0
    %1429 = vmatprep.subr.bf16.mxu0 0
    %1430 = vmatpush2.bf16.msra.mxu0 0
    %1431 = vmatprep.subr.bf16.mxu0 0
    %1432 = vmatpush2.bf16.msra.mxu0 0
    %1433 = vmatprep.subr.bf16.mxu0 0
    %1434 = vmatpush2.bf16.msra.mxu0 0
    %1435 = vmatprep.subr.bf16.mxu0 0
    %1436 = vmatpush2.bf16.msra.mxu0 0
    %1437 = vmatprep.subr.bf16.mxu0 0
    %1438 = vmatpush2.bf16.msra.mxu0 0
    %1439 = vmatprep.subr.bf16.mxu0 0
    %1440 = vmatpush2.bf16.msra.mxu0 0
    %1441 = vmatprep.subr.bf16.mxu0 0
    %1442 = vmatpush2.bf16.msra.mxu0 0
    %1443 = vmatprep.mubr.bf16.mxu0 0
    %1444 = vmatmul.mubr.bf16.gmra.mxu0 %v1409
    %v1445 = vpop.f32.mrf.mxu0
    %v1446 = vadd.f32 0.0, %v1445
    %v1447 = vpop.f32.mrf.mxu0
    %v1448 = vadd.f32 0.0, %v1447
    %v1449 = vpop.f32.mrf.mxu0
    %v1450 = vpop.f32.mrf.mxu0
    %1451 = vdwg.mxu0
    %v1453 = vrot.slane %v1446, 2
    %v1455 = vadd.f32 %v124, %v1453
    %v1456 = vxor.u32 %v1455, 2147483648
    %v1457 = vmul.f32 %v1456, 1.442695
    %v1458 = vpow.pop %v1457
    %v1459 = vadd.f32 %v1458, 1.0
    %v1460 = vrcp.pop %v1459
    %v1461 = vmul.f32 1.0, %v1460
    %v1462 = vadd.f32 %v1446, %v225
    %v1464 = vrot.slane %v1462, 2
    %1465 = vrot.lane.b32.xlu0 %v1464, 64
    %v1466 = vpop.permute.xlu0 %1465
    %v1468 = vmul.f32 %v1461, %v1466
    %1470 = vrot.lane.b32.xlu0 %v1468, 64
    %v1471 = vpop.permute.xlu0 %1470
    %v1473 = vadd.f32 %v124, %v1471
    %v1474 = vtanh.pop %v1473
    %v1475 = vsub.f32 1.0, %v1461
    %1477 = vrot.lane.b32.xlu0 %v1474, 96
    %v1478 = vpop.permute.xlu0 %1477
    %v1480 = vmul.f32 %v1475, %v1478
    %v1482 = vrot.slane %v1308, 6
    %v1484 = vmul.f32 %v1461, %v1482
    %v1485 = vadd.f32 %v1480, %v1484
    %v1486 = vpack.c.bf16 %v1485, %v1485
    %v1488 = vrot.slane %v1486, 3
    %1489 = vrot.lane.b32.xlu0 %v1488, 96
    %v1490 = vpop.permute.xlu0 %1489
    %v1492 = vsel %vm269, %v1490, 0
    %1494 = vmatprep.subr.bf16.mxu0 0
    %1495 = vmatpush1.bf16.msra.mxu0 0
    %1496 = vmatprep.subr.bf16.mxu0 0
    %1497 = vmatpush1.bf16.msra.mxu0 0
    %1498 = vmatprep.subr.bf16.mxu0 0
    %1499 = vmatpush1.bf16.msra.mxu0 0
    %1500 = vmatprep.subr.bf16.mxu0 0
    %1501 = vmatpush1.bf16.msra.mxu0 0
    %1502 = vmatprep.subr.bf16.mxu0 0
    %1503 = vmatpush1.bf16.msra.mxu0 0
    %1504 = vmatprep.subr.bf16.mxu0 0
    %1505 = vmatpush1.bf16.msra.mxu0 0
    %1506 = vmatprep.subr.bf16.mxu0 0
    %1507 = vmatpush1.bf16.msra.mxu0 %v266
    %1508 = vmatprep.subr.bf16.mxu0 0
    %1509 = vmatpush1.bf16.msra.mxu0 %v265
    %1510 = vmatprep.subr.bf16.mxu0 0
    %1511 = vmatpush2.bf16.msra.mxu0 0
    %1512 = vmatprep.subr.bf16.mxu0 0
    %1513 = vmatpush2.bf16.msra.mxu0 0
    %1514 = vmatprep.subr.bf16.mxu0 0
    %1515 = vmatpush2.bf16.msra.mxu0 0
    %1516 = vmatprep.subr.bf16.mxu0 0
    %1517 = vmatpush2.bf16.msra.mxu0 0
    %1518 = vmatprep.subr.bf16.mxu0 0
    %1519 = vmatpush2.bf16.msra.mxu0 0
    %1520 = vmatprep.subr.bf16.mxu0 0
    %1521 = vmatpush2.bf16.msra.mxu0 0
    %1522 = vmatprep.subr.bf16.mxu0 0
    %1523 = vmatpush2.bf16.msra.mxu0 0
    %1524 = vmatprep.subr.bf16.mxu0 0
    %1525 = vmatpush2.bf16.msra.mxu0 0
    %1526 = vmatprep.mubr.bf16.mxu0 0
    %1527 = vmatmul.mubr.bf16.gmra.mxu0 %v1492
    %v1528 = vpop.f32.mrf.mxu0
    %v1529 = vadd.f32 %v252, %v1528
    %v1530 = vpop.f32.mrf.mxu0
    %v1531 = vpop.f32.mrf.mxu0
    %v1532 = vpop.f32.mrf.mxu0
    %1533 = vdwg.mxu0
    %1534 = vrot.lane.b32.xlu0 %v1446, 32
    %v1535 = vpop.permute.xlu0 %1534
    %v1537 = vadd.f32 %v1529, %v1535
    %v1538 = vxor.u32 %v1537, 2147483648
    %v1539 = vmul.f32 %v1538, 1.442695
    %v1540 = vpow.pop %v1539
    %v1541 = vadd.f32 %v1540, 1.0
    %v1542 = vrcp.pop %v1541
    %v1543 = vmul.f32 1.0, %v1542
    %1545 = vrot.lane.b32.xlu0 %v1448, 32
    %v1546 = vpop.permute.xlu0 %1545
    %v1548 = vadd.f32 %v1529, %v1546
    %v1549 = vxor.u32 %v1548, 2147483648
    %v1550 = vmul.f32 %v1549, 1.442695
    %v1551 = vpow.pop %v1550
    %v1552 = vadd.f32 %v1551, 1.0
    %v1553 = vrcp.pop %v1552
    %v1554 = vmul.f32 1.0, %v1553
    %v1555 = vadd.f32 %v1448, %v223
    %1557 = vrot.lane.b32.xlu0 %v1555, 96
    %v1558 = vpop.permute.xlu0 %1557
    %v1560 = vmul.f32 %v1543, %v1558
    %1562 = vrot.lane.b32.xlu0 %v1560, 64
    %v1563 = vpop.permute.xlu0 %1562
    %v1565 = vadd.f32 %v1529, %v1563
    %v1566 = vtanh.pop %v1565
    %v1567 = vsub.f32 1.0, %v1554
    %1569 = vrot.lane.b32.xlu0 %v1566, 96
    %v1570 = vpop.permute.xlu0 %1569
    %v1572 = vmul.f32 %v1567, %v1570
    %v1573 = vmul.f32 %v1554, %v1397
    %v1574 = vadd.f32 %v1572, %v1573
    %v1575 = vld [vmem:[%s7] sm:$0x1]
    %v1577 = vlaneseq
    %v1578 = vshrl.u32 %v1577, 7
    %v1579 = vsub.s32 0, %v1578
    %v1580 = vrot.slane %v1575, %v1579
    %1581 = vrot.lane.b32.xlu0 %v1580, 32
    %v1582 = vpop.permute.xlu0 %1581
    %v1584 = vmul.f32 %v1574, %v1582
    %1586 = vrot.lane.b32.xlu0 %v1584, 96
    %v1587 = vpop.permute.xlu0 %1586
    %vm1589 = vcmask 254976
    %v1590 = vsel %vm1589, %v1587, 0.0
    %1591 = vadd.xlane.f32.xlu0 %v1590
    %v1592 = vpop.xlane.xlu0 %1591
    %v1593 = vld [vmem:[#allocation2] sm:$0x1]
    %v1595 = vlaneseq
    %v1596 = vshrl.u32 %v1595, 7
    %v1597 = vsub.s32 0, %v1596
    %v1598 = vrot.slane %v1593, %v1597
    %v1600 = vadd.f32 %v1592, %v1598
    %vm1601 = vcmask 1024
    %1602 = vst.msk [vmem:[%s9] sm:$0x3] %vm1601, %v1600
    // Predicated region
    $region42: #{baseline_gru_forward.1} parent=1 // pred_check
      _
    $region43: #{baseline_gru_forward.1} parent=1 // pred_check_branch
      %1604 = sbr.rel (0) target = $region45
    $region44: #{baseline_gru_forward.1} parent=1 // pred_region
      _
    $region45: #{baseline_gru_forward.1} parent=1 // pred_fallthru
      _
    // Predicated region
    $region46: #{baseline_gru_forward.1} parent=1 // pred_check
      _
    $region47: #{baseline_gru_forward.1} parent=1 // pred_check_branch
      %1606 = sbr.rel (0) target = $region49
    $region48: #{baseline_gru_forward.1} parent=1 // pred_region
      _
    $region49: #{baseline_gru_forward.1} parent=1 // pred_fallthru
      _
    %1607 = vsyncpa [#allocation4], 1

</llo_original>
